<compile_context>
chip_gen: v7x
topology: tpu7x:2x2x1
jax: 0.10.0
libtpu: 0.0.40
codegen_flags: <defaults>
</compile_context>

<pallas_src>
import functools

import jax
import jax.numpy as jnp
from jax import lax
from jax.experimental import pallas as pl
from jax.experimental.pallas import tpu as pltpu


def _decoder_future_kernel(
    x_ref,        # (T*BP, 2Z)  packed time-major input: [x_t | x_{T-1-t}] per block
    z_ref,        # (B, Z)      latent state
    wl2h_ref,     # (Z, 2H)     latent_to_hidden weight (transposed for z @ W)
    bl2h_ref,     # (1, 2H)     latent_to_hidden bias
    wih_ref,      # (2Z, 6H)    fused input->gates weight, cols [r_f|r_b|z_f|z_b|n_f|n_b]
    bx_ref,       # (1, 6H)     input-side gate bias (b_ih with b_hr/b_hz folded in)
    whh_ref,      # (2H, 6H)    block-diagonal recurrent weight, same column layout
    bhn_ref,      # (1, 2H)     [b_hn_fwd | b_hn_bwd]  (stays inside the r*(...) term)
    wout_ref,     # (2H, F)     hidden_to_output weight (rows 0:H fwd, H:2H bwd)
    bout_ref,     # (1, F)      hidden_to_output bias
    pred_ref,     # (T*BP, F)   output, time-major padded rows
    gx_ref,       # (T*BP, 6H)  VMEM scratch: hoisted input projection
    seq_ref,      # (T*BP, 2H)  VMEM scratch: per-timestep [h_f | h_b]
    hinit_ref,    # (BP, 2H)    VMEM scratch: remapped initial hidden [h_f | h_b]
    *,
    batch,        # B  (real batch rows)
    batch_pad,    # BP (sublane-padded batch rows, multiple of 8)
    future_steps,
):
    B, BP, T = batch, batch_pad, future_steps
    H2 = whh_ref.shape[0]          # 2H
    H = H2 // 2

    # ---- latent_to_hidden fused in-kernel --------------------------------------
    h_lin = (jnp.dot(z_ref[...], wl2h_ref[...], preferred_element_type=jnp.float32)
             + bl2h_ref[...])                                        # (B, 2H)

    # PyTorch does latent_to_hidden(z).view(2, B, H): a row-major re-view that
    # interleaves batch and direction (faithful to VAME — do NOT "fix" to [:H]/[H:]).
    # h0[d, b, :] = h_lin[(d*B+b)//2, ((d*B+b)%2)*H : ((d*B+b)%2)*H + H]
    hinit_ref[...] = jnp.zeros_like(hinit_ref)
    for d in range(2):
        for b in range(B):
            j = d * B + b
            src_r = j // 2
            src_c = (j % 2) * H
            hinit_ref[b:b + 1, d * H:(d + 1) * H] = (
                h_lin[src_r:src_r + 1, src_c:src_c + H])
    h = hinit_ref[...]                                               # (BP, 2H) [h_f|h_b]

    # ---- fused input projection for BOTH directions, all timesteps (one matmul) ----
    gx_ref[...] = (jnp.dot(x_ref[...], wih_ref[...],
                           preferred_element_type=jnp.float32) + bx_ref[...])

    whh = whh_ref[...]                                               # (2H, 6H)
    bhn = jnp.broadcast_to(bhn_ref[...], (BP, H2))                   # hoisted, once

    # ---- fused fwd+bwd GRU recurrence: one block-diagonal MXU op per timestep ----
    # Backward direction consumes x[T-1-t] (already packed into gx) and its hidden
    # state is written back at sequence position T-1-t.
    for t in range(T):
        g_t = gx_ref[t * BP:(t + 1) * BP, :]                         # full sublane tile
        gh = jnp.dot(h, whh, preferred_element_type=jnp.float32)     # (BP, 6H)
        r = jax.nn.sigmoid(g_t[:, 0:H2] + gh[:, 0:H2])
        u = jax.nn.sigmoid(g_t[:, H2:2 * H2] + gh[:, H2:2 * H2])
        n = jnp.tanh(g_t[:, 2 * H2:3 * H2] + r * (gh[:, 2 * H2:3 * H2] + bhn))
        h = (1.0 - u) * n + u * h                                    # (BP, 2H)
        seq_ref[t * BP:(t + 1) * BP, 0:H] = h[:, 0:H]                # forward hidden
        tb = T - 1 - t
        seq_ref[tb * BP:(tb + 1) * BP, H:H2] = h[:, H:H2]            # backward hidden

    # ---- single fused output projection: (T*BP, 2H) @ (2H, F) --------------------
    pred = (jnp.dot(seq_ref[...], wout_ref[...], preferred_element_type=jnp.float32)
            + bout_ref[...])
    pred_ref[...] = pred.astype(pred_ref.dtype)


# ---------------------------- parameters --------------------------------------
def init_decoder_future_params(key, ZDIMS, NUM_FEATURES, hidden_size_pred):
    """PyTorch-style uniform init; GRU gate weights stored pre-stacked as [r | z | n]."""
    H, Z, F = hidden_size_pred, ZDIMS, NUM_FEATURES
    ks = jax.random.split(key, 13)
    k_gru = 1.0 / jnp.sqrt(H)
    k_l2h = 1.0 / jnp.sqrt(Z)
    k_out = 1.0 / jnp.sqrt(2 * H)

    def u(k, shape, a):
        return jax.random.uniform(k, shape, jnp.float32, -a, a)

    return {
        "w_l2h": u(ks[0], (Z, 2 * H), k_l2h),
        "b_l2h": u(ks[1], (2 * H,), k_l2h),
        "wih_f": u(ks[2], (Z, 3 * H), k_gru),
        "whh_f": u(ks[3], (H, 3 * H), k_gru),
        "bih_f": u(ks[4], (1, 3 * H), k_gru),
        "bhh_f": u(ks[5], (1, 3 * H), k_gru),
        "wih_b": u(ks[6], (Z, 3 * H), k_gru),
        "whh_b": u(ks[7], (H, 3 * H), k_gru),
        "bih_b": u(ks[8], (1, 3 * H), k_gru),
        "bhh_b": u(ks[9], (1, 3 * H), k_gru),
        "wout_f": u(ks[10], (H, F), k_out),
        "wout_b": u(ks[11], (H, F), k_out),
        "b_out": u(ks[12], (1, F), k_out),
    }


def prepare_decoder_future_params(p):
    """One-time repack of PyTorch-layout params into the fused kernel layout."""
    H = p["whh_f"].shape[0]
    Z = p["wih_f"].shape[0]

    def cols(w, g):                      # gate slice g of a (*, 3H) matrix [r|z|n]
        return w[:, g * H:(g + 1) * H]

    zZ = jnp.zeros((Z, H), jnp.float32)
    zH = jnp.zeros((H, H), jnp.float32)

    # fused input weight: rows 0:Z act on x_t (forward), rows Z:2Z on x_{T-1-t} (backward)
    w_ih_comb = jnp.concatenate([
        jnp.concatenate([cols(p["wih_f"], 0), zZ, cols(p["wih_f"], 1), zZ,
                         cols(p["wih_f"], 2), zZ], axis=1),
        jnp.concatenate([zZ, cols(p["wih_b"], 0), zZ, cols(p["wih_b"], 1),
                         zZ, cols(p["wih_b"], 2)], axis=1),
    ], axis=0)                                                       # (2Z, 6H)

    # block-diagonal recurrent weight: rows 0:H act on h_f, rows H:2H on h_b
    whh_comb = jnp.concatenate([
        jnp.concatenate([cols(p["whh_f"], 0), zH, cols(p["whh_f"], 1), zH,
                         cols(p["whh_f"], 2), zH], axis=1),
        jnp.concatenate([zH, cols(p["whh_b"], 0), zH, cols(p["whh_b"], 1),
                         zH, cols(p["whh_b"], 2)], axis=1),
    ], axis=0)                                                       # (2H, 6H)

    # fold b_hr / b_hz into the input-side bias (exact per PyTorch GRU semantics);
    # only b_hn must remain inside the r*(...) term.
    bx_comb = jnp.concatenate([
        cols(p["bih_f"], 0) + cols(p["bhh_f"], 0),
        cols(p["bih_b"], 0) + cols(p["bhh_b"], 0),
        cols(p["bih_f"], 1) + cols(p["bhh_f"], 1),
        cols(p["bih_b"], 1) + cols(p["bhh_b"], 1),
        cols(p["bih_f"], 2),
        cols(p["bih_b"], 2),
    ], axis=1)                                                       # (1, 6H)
    bhn_comb = jnp.concatenate([cols(p["bhh_f"], 2), cols(p["bhh_b"], 2)], axis=1)

    return {
        "w_l2h": p["w_l2h"],
        "b_l2h": p["b_l2h"].reshape(1, -1),
        "w_ih_comb": w_ih_comb,
        "bx_comb": bx_comb,
        "whh_comb": whh_comb,
        "bhn_comb": bhn_comb,
        "w_out": jnp.concatenate([p["wout_f"], p["wout_b"]], axis=0),  # (2H, F)
        "b_out": p["b_out"],
    }


# ------------------------------ forward ----------------------------------------
@functools.partial(jax.jit, static_argnames=("future_steps",))
def decoder_future_forward(kparams, inputs, z, *, future_steps):
    """inputs: (B, TEMPORAL_WINDOW, ZDIMS), z: (B, ZDIMS) -> (B, FUTURE_STEPS, NUM_FEATURES)."""
    B, _, Z = inputs.shape
    H = kparams["whh_comb"].shape[0] // 2
    F = kparams["b_out"].shape[-1]
    T = future_steps
    BP = max(8, ((B + 7) // 8) * 8)          # pad batch rows to full sublane tiles

    # inputs[:, :T, :] -> time-major, batch padded to BP, packed [x_t | x_{T-1-t}].
    # All of this fuses into a single tiny XLA copy fusion.
    x_tm = jnp.swapaxes(inputs[:, :T, :].astype(jnp.float32), 0, 1)          # (T, B, Z)
    x_pad = jnp.zeros((T, BP, Z), jnp.float32).at[:, :B, :].set(x_tm)        # (T, BP, Z)
    x_comb = jnp.concatenate([x_pad, x_pad[::-1]], axis=-1).reshape(T * BP, 2 * Z)

    pred_flat = pl.pallas_call(
        functools.partial(_decoder_future_kernel,
                          batch=B, batch_pad=BP, future_steps=T),
        out_shape=jax.ShapeDtypeStruct((T * BP, F), jnp.float32),
        scratch_shapes=[
            pltpu.VMEM((T * BP, 6 * H), jnp.float32),   # gx (hoisted input projection)
            pltpu.VMEM((T * BP, 2 * H), jnp.float32),   # per-timestep [h_f | h_b]
            pltpu.VMEM((BP, 2 * H), jnp.float32),       # remapped initial hidden
        ],
    )(x_comb, z.astype(jnp.float32),
      kparams["w_l2h"], kparams["b_l2h"],
      kparams["w_ih_comb"], kparams["bx_comb"],
      kparams["whh_comb"], kparams["bhn_comb"],
      kparams["w_out"], kparams["b_out"])

    pred = pred_flat.reshape(T, BP, F)[:, :B, :]        # drop padded batch rows
    return jnp.swapaxes(pred, 0, 1)                     # (B, T, F)


# ---------------- pure-JAX reference (for verification) ----------------
def decoder_future_forward_ref(params, inputs, z, *, future_steps):
    B = inputs.shape[0]
    H = params["whh_f"].shape[0]
    T = future_steps

    x = inputs[:, :T, :].astype(jnp.float32)
    x_tm = jnp.transpose(x, (1, 0, 2))                              # (T, B, Z)

    h_lin = z.astype(jnp.float32) @ params["w_l2h"] + params["b_l2h"]
    h0 = h_lin.reshape(2, B, H)                                     # PyTorch .view remap

    def run_dir(x_seq, h_init, wih, whh, bih, bhh):
        def step(h, x_t):
            gx = x_t @ wih + bih
            gh = h @ whh + bhh
            r = jax.nn.sigmoid(gx[:, :H] + gh[:, :H])
            u = jax.nn.sigmoid(gx[:, H:2 * H] + gh[:, H:2 * H])
            n = jnp.tanh(gx[:, 2 * H:] + r * gh[:, 2 * H:])
            h_new = (1.0 - u) * n + u * h
            return h_new, h_new
        _, seq = lax.scan(step, h_init, x_seq)
        return seq

    seq_f = run_dir(x_tm, h0[0], params["wih_f"], params["whh_f"],
                    params["bih_f"], params["bhh_f"])
    seq_b = run_dir(x_tm[::-1], h0[1], params["wih_b"], params["whh_b"],
                    params["bih_b"], params["bhh_b"])[::-1]
    dec_out = jnp.concatenate([seq_f, seq_b], axis=-1)              # (T, B, 2H)
    w_out = jnp.concatenate([params["wout_f"], params["wout_b"]], axis=0)
    pred = dec_out @ w_out + params["b_out"]                        # (T, B, F)
    return jnp.transpose(pred, (1, 0, 2))


if __name__ == "__main__":
    TEMPORAL_WINDOW = 16
    ZDIMS = 8
    NUM_FEATURES = 4
    FUTURE_STEPS = 8
    HIDDEN_SIZE_PRED = 32
    B = 2
    # TODO(synk): nn.GRU dropout_pred is inert for num_layers=1 (and eval); not applied.

    key = jax.random.PRNGKey(0)
    k_params, k_x, k_z = jax.random.split(key, 3)
    params = init_decoder_future_params(k_params, ZDIMS, NUM_FEATURES, HIDDEN_SIZE_PRED)
    kparams = jax.tree_util.tree_map(jax.block_until_ready,
                                     prepare_decoder_future_params(params))
    inputs = jax.random.normal(k_x, (B, TEMPORAL_WINDOW, ZDIMS), dtype=jnp.float32)
    z = jax.random.normal(k_z, (B, ZDIMS), dtype=jnp.float32)

    pred = decoder_future_forward(kparams, inputs, z, future_steps=FUTURE_STEPS)
    pred = jax.block_until_ready(pred)
    assert pred.shape == (B, FUTURE_STEPS, NUM_FEATURES), pred.shape

    ref = jax.block_until_ready(
        decoder_future_forward_ref(params, inputs, z, future_steps=FUTURE_STEPS))
    max_err = float(jnp.max(jnp.abs(pred - ref)))
    assert jnp.allclose(pred, ref, atol=1e-4, rtol=1e-4), max_err

    print("KERNEL_OK")
</pallas_src>

<mosaic_0001>
module attributes {stable_mosaic.version = 11 : i64} {
  func.func @_decoder_future_kernel(%arg0: memref<64x16xf32, #tpu.memory_space<vmem>>, %arg1: memref<2x8xf32, #tpu.memory_space<vmem>>, %arg2: memref<8x64xf32, #tpu.memory_space<vmem>>, %arg3: memref<1x64xf32, #tpu.memory_space<vmem>>, %arg4: memref<16x192xf32, #tpu.memory_space<vmem>>, %arg5: memref<1x192xf32, #tpu.memory_space<vmem>>, %arg6: memref<64x192xf32, #tpu.memory_space<vmem>>, %arg7: memref<1x64xf32, #tpu.memory_space<vmem>>, %arg8: memref<64x4xf32, #tpu.memory_space<vmem>>, %arg9: memref<1x4xf32, #tpu.memory_space<vmem>>, %arg10: memref<64x4xf32, #tpu.memory_space<vmem>>, %arg11: memref<64x192xf32, #tpu.memory_space<vmem>>, %arg12: memref<64x64xf32, #tpu.memory_space<vmem>>, %arg13: memref<8x64xf32, #tpu.memory_space<vmem>>) attributes {dimension_semantics = [], scalar_prefetch = 0 : i64, scratch_operands = 3 : i64, tpu.core_type = #tpu.core_type<tc>} {
    %c0 = arith.constant 0 : index
    %c0_0 = arith.constant 0 : index
    %0 = vector.load %arg1[%c0, %c0_0] : memref<2x8xf32, #tpu.memory_space<vmem>>, vector<2x8xf32>
    %c0_1 = arith.constant 0 : index
    %c0_2 = arith.constant 0 : index
    %1 = vector.load %arg2[%c0_1, %c0_2] : memref<8x64xf32, #tpu.memory_space<vmem>>, vector<8x64xf32>
    %cst = arith.constant dense<0.000000e+00> : vector<2x64xf32>
    %2 = tpu.matmul %0, %1, %cst {dimension_numbers = #tpu.dot_dimension_numbers<[1], [0], [0], [1], [0, 0, 1, 1], [], []>} : vector<2x8xf32>, vector<8x64xf32>, vector<2x64xf32> -> vector<2x64xf32>
    %c0_3 = arith.constant 0 : index
    %c0_4 = arith.constant 0 : index
    %3 = vector.load %arg3[%c0_3, %c0_4] : memref<1x64xf32, #tpu.memory_space<vmem>>, vector<1x64xf32>
    %4 = vector.broadcast %3 : vector<1x64xf32> to vector<2x64xf32>
    %5 = arith.addf %2, %4 : vector<2x64xf32>
    %cst_5 = arith.constant 0.000000e+00 : f32
    %6 = vector.broadcast %cst_5 : f32 to vector<8x64xf32>
    %c0_6 = arith.constant 0 : index
    %c0_7 = arith.constant 0 : index
    %7 = vector.load %arg13[%c0_6, %c0_7] : memref<8x64xf32, #tpu.memory_space<vmem>>, vector<8x64xf32>
    tpu.vector_store %arg13[%c0_6, %c0_7], %6 {strides = array<i32>} : memref<8x64xf32, #tpu.memory_space<vmem>>, vector<8x64xf32>,
    %8 = vector.extract_strided_slice %5 {offsets = [0, 0], sizes = [1, 32], strides = [1, 1]} : vector<2x64xf32> to vector<1x32xf32>
    %c0_8 = arith.constant 0 : index
    %c0_9 = arith.constant 0 : index
    %9 = vector.load %arg13[%c0_8, %c0_9] : memref<8x64xf32, #tpu.memory_space<vmem>>, vector<1x32xf32>
    tpu.vector_store %arg13[%c0_8, %c0_9], %8 {strides = array<i32>} : memref<8x64xf32, #tpu.memory_space<vmem>>, vector<1x32xf32>,
    %10 = vector.extract_strided_slice %5 {offsets = [0, 32], sizes = [1, 32], strides = [1, 1]} : vector<2x64xf32> to vector<1x32xf32>
    %c1 = arith.constant 1 : index
    %c0_10 = arith.constant 0 : index
    %11 = vector.load %arg13[%c1, %c0_10] : memref<8x64xf32, #tpu.memory_space<vmem>>, vector<1x32xf32>
    tpu.vector_store %arg13[%c1, %c0_10], %10 {strides = array<i32>} : memref<8x64xf32, #tpu.memory_space<vmem>>, vector<1x32xf32>,
    %12 = vector.extract_strided_slice %5 {offsets = [1, 0], sizes = [1, 32], strides = [1, 1]} : vector<2x64xf32> to vector<1x32xf32>
    %c0_11 = arith.constant 0 : index
    %c32 = arith.constant 32 : index
    %13 = vector.load %arg13[%c0_11, %c32] : memref<8x64xf32, #tpu.memory_space<vmem>>, vector<1x32xf32>
    tpu.vector_store %arg13[%c0_11, %c32], %12 {strides = array<i32>} : memref<8x64xf32, #tpu.memory_space<vmem>>, vector<1x32xf32>,
    %14 = vector.extract_strided_slice %5 {offsets = [1, 32], sizes = [1, 32], strides = [1, 1]} : vector<2x64xf32> to vector<1x32xf32>
    %c1_12 = arith.constant 1 : index
    %c32_13 = arith.constant 32 : index
    %15 = vector.load %arg13[%c1_12, %c32_13] : memref<8x64xf32, #tpu.memory_space<vmem>>, vector<1x32xf32>
    tpu.vector_store %arg13[%c1_12, %c32_13], %14 {strides = array<i32>} : memref<8x64xf32, #tpu.memory_space<vmem>>, vector<1x32xf32>,
    %c0_14 = arith.constant 0 : index
    %c0_15 = arith.constant 0 : index
    %16 = vector.load %arg13[%c0_14, %c0_15] : memref<8x64xf32, #tpu.memory_space<vmem>>, vector<8x64xf32>
    %c0_16 = arith.constant 0 : index
    %c0_17 = arith.constant 0 : index
    %17 = vector.load %arg0[%c0_16, %c0_17] : memref<64x16xf32, #tpu.memory_space<vmem>>, vector<64x16xf32>
    %c0_18 = arith.constant 0 : index
    %c0_19 = arith.constant 0 : index
    %18 = vector.load %arg4[%c0_18, %c0_19] : memref<16x192xf32, #tpu.memory_space<vmem>>, vector<16x192xf32>
    %cst_20 = arith.constant dense<0.000000e+00> : vector<64x192xf32>
    %19 = tpu.matmul %17, %18, %cst_20 {dimension_numbers = #tpu.dot_dimension_numbers<[1], [0], [0], [1], [0, 0, 1, 1], [], []>} : vector<64x16xf32>, vector<16x192xf32>, vector<64x192xf32> -> vector<64x192xf32>
    %c0_21 = arith.constant 0 : index
    %c0_22 = arith.constant 0 : index
    %20 = vector.load %arg5[%c0_21, %c0_22] : memref<1x192xf32, #tpu.memory_space<vmem>>, vector<1x192xf32>
    %21 = vector.broadcast %20 : vector<1x192xf32> to vector<64x192xf32>
    %22 = arith.addf %19, %21 : vector<64x192xf32>
    %c0_23 = arith.constant 0 : index
    %c0_24 = arith.constant 0 : index
    %23 = vector.load %arg11[%c0_23, %c0_24] : memref<64x192xf32, #tpu.memory_space<vmem>>, vector<64x192xf32>
    tpu.vector_store %arg11[%c0_23, %c0_24], %22 {strides = array<i32>} : memref<64x192xf32, #tpu.memory_space<vmem>>, vector<64x192xf32>,
    %c0_25 = arith.constant 0 : index
    %c0_26 = arith.constant 0 : index
    %24 = vector.load %arg6[%c0_25, %c0_26] : memref<64x192xf32, #tpu.memory_space<vmem>>, vector<64x192xf32>
    %c0_27 = arith.constant 0 : index
    %c0_28 = arith.constant 0 : index
    %25 = vector.load %arg7[%c0_27, %c0_28] : memref<1x64xf32, #tpu.memory_space<vmem>>, vector<1x64xf32>
    %26 = vector.shape_cast %25 : vector<1x64xf32> to vector<1x64xf32>
    %27 = vector.broadcast %26 : vector<1x64xf32> to vector<8x64xf32>
    %c0_29 = arith.constant 0 : index
    %c0_30 = arith.constant 0 : index
    %28 = vector.load %arg11[%c0_29, %c0_30] : memref<64x192xf32, #tpu.memory_space<vmem>>, vector<8x192xf32>
    %cst_31 = arith.constant dense<0.000000e+00> : vector<8x192xf32>
    %29 = tpu.matmul %16, %24, %cst_31 {dimension_numbers = #tpu.dot_dimension_numbers<[1], [0], [0], [1], [0, 0, 1, 1], [], []>} : vector<8x64xf32>, vector<64x192xf32>, vector<8x192xf32> -> vector<8x192xf32>
    %30 = vector.extract_strided_slice %28 {offsets = [0, 0], sizes = [8, 64], strides = [1, 1]} : vector<8x192xf32> to vector<8x64xf32>
    %31 = vector.extract_strided_slice %29 {offsets = [0, 0], sizes = [8, 64], strides = [1, 1]} : vector<8x192xf32> to vector<8x64xf32>
    %32 = arith.addf %30, %31 : vector<8x64xf32>
    %33 = arith.negf %32 : vector<8x64xf32>
    %34 = math.exp %33 : vector<8x64xf32>
    %cst_32 = arith.constant 1.000000e+00 : f32
    %35 = vector.broadcast %cst_32 : f32 to vector<8x64xf32>
    %36 = arith.addf %35, %34 : vector<8x64xf32>
    %37 = arith.divf %35, %36 : vector<8x64xf32>
    %38 = vector.extract_strided_slice %28 {offsets = [0, 64], sizes = [8, 64], strides = [1, 1]} : vector<8x192xf32> to vector<8x64xf32>
    %39 = vector.extract_strided_slice %29 {offsets = [0, 64], sizes = [8, 64], strides = [1, 1]} : vector<8x192xf32> to vector<8x64xf32>
    %40 = arith.addf %38, %39 : vector<8x64xf32>
    %41 = arith.negf %40 : vector<8x64xf32>
    %42 = math.exp %41 : vector<8x64xf32>
    %cst_33 = arith.constant 1.000000e+00 : f32
    %43 = vector.broadcast %cst_33 : f32 to vector<8x64xf32>
    %44 = arith.addf %43, %42 : vector<8x64xf32>
    %45 = arith.divf %43, %44 : vector<8x64xf32>
    %46 = vector.extract_strided_slice %28 {offsets = [0, 128], sizes = [8, 64], strides = [1, 1]} : vector<8x192xf32> to vector<8x64xf32>
    %47 = vector.extract_strided_slice %29 {offsets = [0, 128], sizes = [8, 64], strides = [1, 1]} : vector<8x192xf32> to vector<8x64xf32>
    %48 = arith.addf %47, %27 : vector<8x64xf32>
    %49 = arith.mulf %37, %48 : vector<8x64xf32>
    %50 = arith.addf %46, %49 : vector<8x64xf32>
    %51 = math.tanh %50 : vector<8x64xf32>
    %cst_34 = arith.constant 1.000000e+00 : f32
    %52 = vector.broadcast %cst_34 : f32 to vector<8x64xf32>
    %53 = arith.subf %52, %45 : vector<8x64xf32>
    %54 = arith.mulf %53, %51 : vector<8x64xf32>
    %55 = arith.mulf %45, %16 : vector<8x64xf32>
    %56 = arith.addf %54, %55 : vector<8x64xf32>
    %57 = vector.extract_strided_slice %56 {offsets = [0, 0], sizes = [8, 32], strides = [1, 1]} : vector<8x64xf32> to vector<8x32xf32>
    %c0_35 = arith.constant 0 : index
    %c0_36 = arith.constant 0 : index
    %58 = vector.load %arg12[%c0_35, %c0_36] : memref<64x64xf32, #tpu.memory_space<vmem>>, vector<8x32xf32>
    tpu.vector_store %arg12[%c0_35, %c0_36], %57 {strides = array<i32>} : memref<64x64xf32, #tpu.memory_space<vmem>>, vector<8x32xf32>,
    %59 = vector.extract_strided_slice %56 {offsets = [0, 32], sizes = [8, 32], strides = [1, 1]} : vector<8x64xf32> to vector<8x32xf32>
    %c56 = arith.constant 56 : index
    %c32_37 = arith.constant 32 : index
    %60 = vector.load %arg12[%c56, %c32_37] : memref<64x64xf32, #tpu.memory_space<vmem>>, vector<8x32xf32>
    tpu.vector_store %arg12[%c56, %c32_37], %59 {strides = array<i32>} : memref<64x64xf32, #tpu.memory_space<vmem>>, vector<8x32xf32>,
    %c8 = arith.constant 8 : index
    %c0_38 = arith.constant 0 : index
    %61 = vector.load %arg11[%c8, %c0_38] : memref<64x192xf32, #tpu.memory_space<vmem>>, vector<8x192xf32>
    %cst_39 = arith.constant dense<0.000000e+00> : vector<8x192xf32>
    %62 = tpu.matmul %56, %24, %cst_39 {dimension_numbers = #tpu.dot_dimension_numbers<[1], [0], [0], [1], [0, 0, 1, 1], [], []>} : vector<8x64xf32>, vector<64x192xf32>, vector<8x192xf32> -> vector<8x192xf32>
    %63 = vector.extract_strided_slice %61 {offsets = [0, 0], sizes = [8, 64], strides = [1, 1]} : vector<8x192xf32> to vector<8x64xf32>
    %64 = vector.extract_strided_slice %62 {offsets = [0, 0], sizes = [8, 64], strides = [1, 1]} : vector<8x192xf32> to vector<8x64xf32>
    %65 = arith.addf %63, %64 : vector<8x64xf32>
    %66 = arith.negf %65 : vector<8x64xf32>
    %67 = math.exp %66 : vector<8x64xf32>
    %cst_40 = arith.constant 1.000000e+00 : f32
    %68 = vector.broadcast %cst_40 : f32 to vector<8x64xf32>
    %69 = arith.addf %68, %67 : vector<8x64xf32>
    %70 = arith.divf %68, %69 : vector<8x64xf32>
    %71 = vector.extract_strided_slice %61 {offsets = [0, 64], sizes = [8, 64], strides = [1, 1]} : vector<8x192xf32> to vector<8x64xf32>
    %72 = vector.extract_strided_slice %62 {offsets = [0, 64], sizes = [8, 64], strides = [1, 1]} : vector<8x192xf32> to vector<8x64xf32>
    %73 = arith.addf %71, %72 : vector<8x64xf32>
    %74 = arith.negf %73 : vector<8x64xf32>
    %75 = math.exp %74 : vector<8x64xf32>
    %cst_41 = arith.constant 1.000000e+00 : f32
    %76 = vector.broadcast %cst_41 : f32 to vector<8x64xf32>
    %77 = arith.addf %76, %75 : vector<8x64xf32>
    %78 = arith.divf %76, %77 : vector<8x64xf32>
    %79 = vector.extract_strided_slice %61 {offsets = [0, 128], sizes = [8, 64], strides = [1, 1]} : vector<8x192xf32> to vector<8x64xf32>
    %80 = vector.extract_strided_slice %62 {offsets = [0, 128], sizes = [8, 64], strides = [1, 1]} : vector<8x192xf32> to vector<8x64xf32>
    %81 = arith.addf %80, %27 : vector<8x64xf32>
    %82 = arith.mulf %70, %81 : vector<8x64xf32>
    %83 = arith.addf %79, %82 : vector<8x64xf32>
    %84 = math.tanh %83 : vector<8x64xf32>
    %cst_42 = arith.constant 1.000000e+00 : f32
    %85 = vector.broadcast %cst_42 : f32 to vector<8x64xf32>
    %86 = arith.subf %85, %78 : vector<8x64xf32>
    %87 = arith.mulf %86, %84 : vector<8x64xf32>
    %88 = arith.mulf %78, %56 : vector<8x64xf32>
    %89 = arith.addf %87, %88 : vector<8x64xf32>
    %90 = vector.extract_strided_slice %89 {offsets = [0, 0], sizes = [8, 32], strides = [1, 1]} : vector<8x64xf32> to vector<8x32xf32>
    %c8_43 = arith.constant 8 : index
    %c0_44 = arith.constant 0 : index
    %91 = vector.load %arg12[%c8_43, %c0_44] : memref<64x64xf32, #tpu.memory_space<vmem>>, vector<8x32xf32>
    tpu.vector_store %arg12[%c8_43, %c0_44], %90 {strides = array<i32>} : memref<64x64xf32, #tpu.memory_space<vmem>>, vector<8x32xf32>,
    %92 = vector.extract_strided_slice %89 {offsets = [0, 32], sizes = [8, 32], strides = [1, 1]} : vector<8x64xf32> to vector<8x32xf32>
    %c48 = arith.constant 48 : index
    %c32_45 = arith.constant 32 : index
    %93 = vector.load %arg12[%c48, %c32_45] : memref<64x64xf32, #tpu.memory_space<vmem>>, vector<8x32xf32>
    tpu.vector_store %arg12[%c48, %c32_45], %92 {strides = array<i32>} : memref<64x64xf32, #tpu.memory_space<vmem>>, vector<8x32xf32>,
    %c16 = arith.constant 16 : index
    %c0_46 = arith.constant 0 : index
    %94 = vector.load %arg11[%c16, %c0_46] : memref<64x192xf32, #tpu.memory_space<vmem>>, vector<8x192xf32>
    %cst_47 = arith.constant dense<0.000000e+00> : vector<8x192xf32>
    %95 = tpu.matmul %89, %24, %cst_47 {dimension_numbers = #tpu.dot_dimension_numbers<[1], [0], [0], [1], [0, 0, 1, 1], [], []>} : vector<8x64xf32>, vector<64x192xf32>, vector<8x192xf32> -> vector<8x192xf32>
    %96 = vector.extract_strided_slice %94 {offsets = [0, 0], sizes = [8, 64], strides = [1, 1]} : vector<8x192xf32> to vector<8x64xf32>
    %97 = vector.extract_strided_slice %95 {offsets = [0, 0], sizes = [8, 64], strides = [1, 1]} : vector<8x192xf32> to vector<8x64xf32>
    %98 = arith.addf %96, %97 : vector<8x64xf32>
    %99 = arith.negf %98 : vector<8x64xf32>
    %100 = math.exp %99 : vector<8x64xf32>
    %cst_48 = arith.constant 1.000000e+00 : f32
    %101 = vector.broadcast %cst_48 : f32 to vector<8x64xf32>
    %102 = arith.addf %101, %100 : vector<8x64xf32>
    %103 = arith.divf %101, %102 : vector<8x64xf32>
    %104 = vector.extract_strided_slice %94 {offsets = [0, 64], sizes = [8, 64], strides = [1, 1]} : vector<8x192xf32> to vector<8x64xf32>
    %105 = vector.extract_strided_slice %95 {offsets = [0, 64], sizes = [8, 64], strides = [1, 1]} : vector<8x192xf32> to vector<8x64xf32>
    %106 = arith.addf %104, %105 : vector<8x64xf32>
    %107 = arith.negf %106 : vector<8x64xf32>
    %108 = math.exp %107 : vector<8x64xf32>
    %cst_49 = arith.constant 1.000000e+00 : f32
    %109 = vector.broadcast %cst_49 : f32 to vector<8x64xf32>
    %110 = arith.addf %109, %108 : vector<8x64xf32>
    %111 = arith.divf %109, %110 : vector<8x64xf32>
    %112 = vector.extract_strided_slice %94 {offsets = [0, 128], sizes = [8, 64], strides = [1, 1]} : vector<8x192xf32> to vector<8x64xf32>
    %113 = vector.extract_strided_slice %95 {offsets = [0, 128], sizes = [8, 64], strides = [1, 1]} : vector<8x192xf32> to vector<8x64xf32>
    %114 = arith.addf %113, %27 : vector<8x64xf32>
    %115 = arith.mulf %103, %114 : vector<8x64xf32>
    %116 = arith.addf %112, %115 : vector<8x64xf32>
    %117 = math.tanh %116 : vector<8x64xf32>
    %cst_50 = arith.constant 1.000000e+00 : f32
    %118 = vector.broadcast %cst_50 : f32 to vector<8x64xf32>
    %119 = arith.subf %118, %111 : vector<8x64xf32>
    %120 = arith.mulf %119, %117 : vector<8x64xf32>
    %121 = arith.mulf %111, %89 : vector<8x64xf32>
    %122 = arith.addf %120, %121 : vector<8x64xf32>
    %123 = vector.extract_strided_slice %122 {offsets = [0, 0], sizes = [8, 32], strides = [1, 1]} : vector<8x64xf32> to vector<8x32xf32>
    %c16_51 = arith.constant 16 : index
    %c0_52 = arith.constant 0 : index
    %124 = vector.load %arg12[%c16_51, %c0_52] : memref<64x64xf32, #tpu.memory_space<vmem>>, vector<8x32xf32>
    tpu.vector_store %arg12[%c16_51, %c0_52], %123 {strides = array<i32>} : memref<64x64xf32, #tpu.memory_space<vmem>>, vector<8x32xf32>,
    %125 = vector.extract_strided_slice %122 {offsets = [0, 32], sizes = [8, 32], strides = [1, 1]} : vector<8x64xf32> to vector<8x32xf32>
    %c40 = arith.constant 40 : index
    %c32_53 = arith.constant 32 : index
    %126 = vector.load %arg12[%c40, %c32_53] : memref<64x64xf32, #tpu.memory_space<vmem>>, vector<8x32xf32>
    tpu.vector_store %arg12[%c40, %c32_53], %125 {strides = array<i32>} : memref<64x64xf32, #tpu.memory_space<vmem>>, vector<8x32xf32>,
    %c24 = arith.constant 24 : index
    %c0_54 = arith.constant 0 : index
    %127 = vector.load %arg11[%c24, %c0_54] : memref<64x192xf32, #tpu.memory_space<vmem>>, vector<8x192xf32>
    %cst_55 = arith.constant dense<0.000000e+00> : vector<8x192xf32>
    %128 = tpu.matmul %122, %24, %cst_55 {dimension_numbers = #tpu.dot_dimension_numbers<[1], [0], [0], [1], [0, 0, 1, 1], [], []>} : vector<8x64xf32>, vector<64x192xf32>, vector<8x192xf32> -> vector<8x192xf32>
    %129 = vector.extract_strided_slice %127 {offsets = [0, 0], sizes = [8, 64], strides = [1, 1]} : vector<8x192xf32> to vector<8x64xf32>
    %130 = vector.extract_strided_slice %128 {offsets = [0, 0], sizes = [8, 64], strides = [1, 1]} : vector<8x192xf32> to vector<8x64xf32>
    %131 = arith.addf %129, %130 : vector<8x64xf32>
    %132 = arith.negf %131 : vector<8x64xf32>
    %133 = math.exp %132 : vector<8x64xf32>
    %cst_56 = arith.constant 1.000000e+00 : f32
    %134 = vector.broadcast %cst_56 : f32 to vector<8x64xf32>
    %135 = arith.addf %134, %133 : vector<8x64xf32>
    %136 = arith.divf %134, %135 : vector<8x64xf32>
    %137 = vector.extract_strided_slice %127 {offsets = [0, 64], sizes = [8, 64], strides = [1, 1]} : vector<8x192xf32> to vector<8x64xf32>
    %138 = vector.extract_strided_slice %128 {offsets = [0, 64], sizes = [8, 64], strides = [1, 1]} : vector<8x192xf32> to vector<8x64xf32>
    %139 = arith.addf %137, %138 : vector<8x64xf32>
    %140 = arith.negf %139 : vector<8x64xf32>
    %141 = math.exp %140 : vector<8x64xf32>
    %cst_57 = arith.constant 1.000000e+00 : f32
    %142 = vector.broadcast %cst_57 : f32 to vector<8x64xf32>
    %143 = arith.addf %142, %141 : vector<8x64xf32>
    %144 = arith.divf %142, %143 : vector<8x64xf32>
    %145 = vector.extract_strided_slice %127 {offsets = [0, 128], sizes = [8, 64], strides = [1, 1]} : vector<8x192xf32> to vector<8x64xf32>
    %146 = vector.extract_strided_slice %128 {offsets = [0, 128], sizes = [8, 64], strides = [1, 1]} : vector<8x192xf32> to vector<8x64xf32>
    %147 = arith.addf %146, %27 : vector<8x64xf32>
    %148 = arith.mulf %136, %147 : vector<8x64xf32>
    %149 = arith.addf %145, %148 : vector<8x64xf32>
    %150 = math.tanh %149 : vector<8x64xf32>
    %cst_58 = arith.constant 1.000000e+00 : f32
    %151 = vector.broadcast %cst_58 : f32 to vector<8x64xf32>
    %152 = arith.subf %151, %144 : vector<8x64xf32>
    %153 = arith.mulf %152, %150 : vector<8x64xf32>
    %154 = arith.mulf %144, %122 : vector<8x64xf32>
    %155 = arith.addf %153, %154 : vector<8x64xf32>
    %156 = vector.extract_strided_slice %155 {offsets = [0, 0], sizes = [8, 32], strides = [1, 1]} : vector<8x64xf32> to vector<8x32xf32>
    %c24_59 = arith.constant 24 : index
    %c0_60 = arith.constant 0 : index
    %157 = vector.load %arg12[%c24_59, %c0_60] : memref<64x64xf32, #tpu.memory_space<vmem>>, vector<8x32xf32>
    tpu.vector_store %arg12[%c24_59, %c0_60], %156 {strides = array<i32>} : memref<64x64xf32, #tpu.memory_space<vmem>>, vector<8x32xf32>,
    %158 = vector.extract_strided_slice %155 {offsets = [0, 32], sizes = [8, 32], strides = [1, 1]} : vector<8x64xf32> to vector<8x32xf32>
    %c32_61 = arith.constant 32 : index
    %c32_62 = arith.constant 32 : index
    %159 = vector.load %arg12[%c32_61, %c32_62] : memref<64x64xf32, #tpu.memory_space<vmem>>, vector<8x32xf32>
    tpu.vector_store %arg12[%c32_61, %c32_62], %158 {strides = array<i32>} : memref<64x64xf32, #tpu.memory_space<vmem>>, vector<8x32xf32>,
    %c32_63 = arith.constant 32 : index
    %c0_64 = arith.constant 0 : index
    %160 = vector.load %arg11[%c32_63, %c0_64] : memref<64x192xf32, #tpu.memory_space<vmem>>, vector<8x192xf32>
    %cst_65 = arith.constant dense<0.000000e+00> : vector<8x192xf32>
    %161 = tpu.matmul %155, %24, %cst_65 {dimension_numbers = #tpu.dot_dimension_numbers<[1], [0], [0], [1], [0, 0, 1, 1], [], []>} : vector<8x64xf32>, vector<64x192xf32>, vector<8x192xf32> -> vector<8x192xf32>
    %162 = vector.extract_strided_slice %160 {offsets = [0, 0], sizes = [8, 64], strides = [1, 1]} : vector<8x192xf32> to vector<8x64xf32>
    %163 = vector.extract_strided_slice %161 {offsets = [0, 0], sizes = [8, 64], strides = [1, 1]} : vector<8x192xf32> to vector<8x64xf32>
    %164 = arith.addf %162, %163 : vector<8x64xf32>
    %165 = arith.negf %164 : vector<8x64xf32>
    %166 = math.exp %165 : vector<8x64xf32>
    %cst_66 = arith.constant 1.000000e+00 : f32
    %167 = vector.broadcast %cst_66 : f32 to vector<8x64xf32>
    %168 = arith.addf %167, %166 : vector<8x64xf32>
    %169 = arith.divf %167, %168 : vector<8x64xf32>
    %170 = vector.extract_strided_slice %160 {offsets = [0, 64], sizes = [8, 64], strides = [1, 1]} : vector<8x192xf32> to vector<8x64xf32>
    %171 = vector.extract_strided_slice %161 {offsets = [0, 64], sizes = [8, 64], strides = [1, 1]} : vector<8x192xf32> to vector<8x64xf32>
    %172 = arith.addf %170, %171 : vector<8x64xf32>
    %173 = arith.negf %172 : vector<8x64xf32>
    %174 = math.exp %173 : vector<8x64xf32>
    %cst_67 = arith.constant 1.000000e+00 : f32
    %175 = vector.broadcast %cst_67 : f32 to vector<8x64xf32>
    %176 = arith.addf %175, %174 : vector<8x64xf32>
    %177 = arith.divf %175, %176 : vector<8x64xf32>
    %178 = vector.extract_strided_slice %160 {offsets = [0, 128], sizes = [8, 64], strides = [1, 1]} : vector<8x192xf32> to vector<8x64xf32>
    %179 = vector.extract_strided_slice %161 {offsets = [0, 128], sizes = [8, 64], strides = [1, 1]} : vector<8x192xf32> to vector<8x64xf32>
    %180 = arith.addf %179, %27 : vector<8x64xf32>
    %181 = arith.mulf %169, %180 : vector<8x64xf32>
    %182 = arith.addf %178, %181 : vector<8x64xf32>
    %183 = math.tanh %182 : vector<8x64xf32>
    %cst_68 = arith.constant 1.000000e+00 : f32
    %184 = vector.broadcast %cst_68 : f32 to vector<8x64xf32>
    %185 = arith.subf %184, %177 : vector<8x64xf32>
    %186 = arith.mulf %185, %183 : vector<8x64xf32>
    %187 = arith.mulf %177, %155 : vector<8x64xf32>
    %188 = arith.addf %186, %187 : vector<8x64xf32>
    %189 = vector.extract_strided_slice %188 {offsets = [0, 0], sizes = [8, 32], strides = [1, 1]} : vector<8x64xf32> to vector<8x32xf32>
    %c32_69 = arith.constant 32 : index
    %c0_70 = arith.constant 0 : index
    %190 = vector.load %arg12[%c32_69, %c0_70] : memref<64x64xf32, #tpu.memory_space<vmem>>, vector<8x32xf32>
    tpu.vector_store %arg12[%c32_69, %c0_70], %189 {strides = array<i32>} : memref<64x64xf32, #tpu.memory_space<vmem>>, vector<8x32xf32>,
    %191 = vector.extract_strided_slice %188 {offsets = [0, 32], sizes = [8, 32], strides = [1, 1]} : vector<8x64xf32> to vector<8x32xf32>
    %c24_71 = arith.constant 24 : index
    %c32_72 = arith.constant 32 : index
    %192 = vector.load %arg12[%c24_71, %c32_72] : memref<64x64xf32, #tpu.memory_space<vmem>>, vector<8x32xf32>
    tpu.vector_store %arg12[%c24_71, %c32_72], %191 {strides = array<i32>} : memref<64x64xf32, #tpu.memory_space<vmem>>, vector<8x32xf32>,
    %c40_73 = arith.constant 40 : index
    %c0_74 = arith.constant 0 : index
    %193 = vector.load %arg11[%c40_73, %c0_74] : memref<64x192xf32, #tpu.memory_space<vmem>>, vector<8x192xf32>
    %cst_75 = arith.constant dense<0.000000e+00> : vector<8x192xf32>
    %194 = tpu.matmul %188, %24, %cst_75 {dimension_numbers = #tpu.dot_dimension_numbers<[1], [0], [0], [1], [0, 0, 1, 1], [], []>} : vector<8x64xf32>, vector<64x192xf32>, vector<8x192xf32> -> vector<8x192xf32>
    %195 = vector.extract_strided_slice %193 {offsets = [0, 0], sizes = [8, 64], strides = [1, 1]} : vector<8x192xf32> to vector<8x64xf32>
    %196 = vector.extract_strided_slice %194 {offsets = [0, 0], sizes = [8, 64], strides = [1, 1]} : vector<8x192xf32> to vector<8x64xf32>
    %197 = arith.addf %195, %196 : vector<8x64xf32>
    %198 = arith.negf %197 : vector<8x64xf32>
    %199 = math.exp %198 : vector<8x64xf32>
    %cst_76 = arith.constant 1.000000e+00 : f32
    %200 = vector.broadcast %cst_76 : f32 to vector<8x64xf32>
    %201 = arith.addf %200, %199 : vector<8x64xf32>
    %202 = arith.divf %200, %201 : vector<8x64xf32>
    %203 = vector.extract_strided_slice %193 {offsets = [0, 64], sizes = [8, 64], strides = [1, 1]} : vector<8x192xf32> to vector<8x64xf32>
    %204 = vector.extract_strided_slice %194 {offsets = [0, 64], sizes = [8, 64], strides = [1, 1]} : vector<8x192xf32> to vector<8x64xf32>
    %205 = arith.addf %203, %204 : vector<8x64xf32>
    %206 = arith.negf %205 : vector<8x64xf32>
    %207 = math.exp %206 : vector<8x64xf32>
    %cst_77 = arith.constant 1.000000e+00 : f32
    %208 = vector.broadcast %cst_77 : f32 to vector<8x64xf32>
    %209 = arith.addf %208, %207 : vector<8x64xf32>
    %210 = arith.divf %208, %209 : vector<8x64xf32>
    %211 = vector.extract_strided_slice %193 {offsets = [0, 128], sizes = [8, 64], strides = [1, 1]} : vector<8x192xf32> to vector<8x64xf32>
    %212 = vector.extract_strided_slice %194 {offsets = [0, 128], sizes = [8, 64], strides = [1, 1]} : vector<8x192xf32> to vector<8x64xf32>
    %213 = arith.addf %212, %27 : vector<8x64xf32>
    %214 = arith.mulf %202, %213 : vector<8x64xf32>
    %215 = arith.addf %211, %214 : vector<8x64xf32>
    %216 = math.tanh %215 : vector<8x64xf32>
    %cst_78 = arith.constant 1.000000e+00 : f32
    %217 = vector.broadcast %cst_78 : f32 to vector<8x64xf32>
    %218 = arith.subf %217, %210 : vector<8x64xf32>
    %219 = arith.mulf %218, %216 : vector<8x64xf32>
    %220 = arith.mulf %210, %188 : vector<8x64xf32>
    %221 = arith.addf %219, %220 : vector<8x64xf32>
    %222 = vector.extract_strided_slice %221 {offsets = [0, 0], sizes = [8, 32], strides = [1, 1]} : vector<8x64xf32> to vector<8x32xf32>
    %c40_79 = arith.constant 40 : index
    %c0_80 = arith.constant 0 : index
    %223 = vector.load %arg12[%c40_79, %c0_80] : memref<64x64xf32, #tpu.memory_space<vmem>>, vector<8x32xf32>
    tpu.vector_store %arg12[%c40_79, %c0_80], %222 {strides = array<i32>} : memref<64x64xf32, #tpu.memory_space<vmem>>, vector<8x32xf32>,
    %224 = vector.extract_strided_slice %221 {offsets = [0, 32], sizes = [8, 32], strides = [1, 1]} : vector<8x64xf32> to vector<8x32xf32>
    %c16_81 = arith.constant 16 : index
    %c32_82 = arith.constant 32 : index
    %225 = vector.load %arg12[%c16_81, %c32_82] : memref<64x64xf32, #tpu.memory_space<vmem>>, vector<8x32xf32>
    tpu.vector_store %arg12[%c16_81, %c32_82], %224 {strides = array<i32>} : memref<64x64xf32, #tpu.memory_space<vmem>>, vector<8x32xf32>,
    %c48_83 = arith.constant 48 : index
    %c0_84 = arith.constant 0 : index
    %226 = vector.load %arg11[%c48_83, %c0_84] : memref<64x192xf32, #tpu.memory_space<vmem>>, vector<8x192xf32>
    %cst_85 = arith.constant dense<0.000000e+00> : vector<8x192xf32>
    %227 = tpu.matmul %221, %24, %cst_85 {dimension_numbers = #tpu.dot_dimension_numbers<[1], [0], [0], [1], [0, 0, 1, 1], [], []>} : vector<8x64xf32>, vector<64x192xf32>, vector<8x192xf32> -> vector<8x192xf32>
    %228 = vector.extract_strided_slice %226 {offsets = [0, 0], sizes = [8, 64], strides = [1, 1]} : vector<8x192xf32> to vector<8x64xf32>
    %229 = vector.extract_strided_slice %227 {offsets = [0, 0], sizes = [8, 64], strides = [1, 1]} : vector<8x192xf32> to vector<8x64xf32>
    %230 = arith.addf %228, %229 : vector<8x64xf32>
    %231 = arith.negf %230 : vector<8x64xf32>
    %232 = math.exp %231 : vector<8x64xf32>
    %cst_86 = arith.constant 1.000000e+00 : f32
    %233 = vector.broadcast %cst_86 : f32 to vector<8x64xf32>
    %234 = arith.addf %233, %232 : vector<8x64xf32>
    %235 = arith.divf %233, %234 : vector<8x64xf32>
    %236 = vector.extract_strided_slice %226 {offsets = [0, 64], sizes = [8, 64], strides = [1, 1]} : vector<8x192xf32> to vector<8x64xf32>
    %237 = vector.extract_strided_slice %227 {offsets = [0, 64], sizes = [8, 64], strides = [1, 1]} : vector<8x192xf32> to vector<8x64xf32>
    %238 = arith.addf %236, %237 : vector<8x64xf32>
    %239 = arith.negf %238 : vector<8x64xf32>
    %240 = math.exp %239 : vector<8x64xf32>
    %cst_87 = arith.constant 1.000000e+00 : f32
    %241 = vector.broadcast %cst_87 : f32 to vector<8x64xf32>
    %242 = arith.addf %241, %240 : vector<8x64xf32>
    %243 = arith.divf %241, %242 : vector<8x64xf32>
    %244 = vector.extract_strided_slice %226 {offsets = [0, 128], sizes = [8, 64], strides = [1, 1]} : vector<8x192xf32> to vector<8x64xf32>
    %245 = vector.extract_strided_slice %227 {offsets = [0, 128], sizes = [8, 64], strides = [1, 1]} : vector<8x192xf32> to vector<8x64xf32>
    %246 = arith.addf %245, %27 : vector<8x64xf32>
    %247 = arith.mulf %235, %246 : vector<8x64xf32>
    %248 = arith.addf %244, %247 : vector<8x64xf32>
    %249 = math.tanh %248 : vector<8x64xf32>
    %cst_88 = arith.constant 1.000000e+00 : f32
    %250 = vector.broadcast %cst_88 : f32 to vector<8x64xf32>
    %251 = arith.subf %250, %243 : vector<8x64xf32>
    %252 = arith.mulf %251, %249 : vector<8x64xf32>
    %253 = arith.mulf %243, %221 : vector<8x64xf32>
    %254 = arith.addf %252, %253 : vector<8x64xf32>
    %255 = vector.extract_strided_slice %254 {offsets = [0, 0], sizes = [8, 32], strides = [1, 1]} : vector<8x64xf32> to vector<8x32xf32>
    %c48_89 = arith.constant 48 : index
    %c0_90 = arith.constant 0 : index
    %256 = vector.load %arg12[%c48_89, %c0_90] : memref<64x64xf32, #tpu.memory_space<vmem>>, vector<8x32xf32>
    tpu.vector_store %arg12[%c48_89, %c0_90], %255 {strides = array<i32>} : memref<64x64xf32, #tpu.memory_space<vmem>>, vector<8x32xf32>,
    %257 = vector.extract_strided_slice %254 {offsets = [0, 32], sizes = [8, 32], strides = [1, 1]} : vector<8x64xf32> to vector<8x32xf32>
    %c8_91 = arith.constant 8 : index
    %c32_92 = arith.constant 32 : index
    %258 = vector.load %arg12[%c8_91, %c32_92] : memref<64x64xf32, #tpu.memory_space<vmem>>, vector<8x32xf32>
    tpu.vector_store %arg12[%c8_91, %c32_92], %257 {strides = array<i32>} : memref<64x64xf32, #tpu.memory_space<vmem>>, vector<8x32xf32>,
    %c56_93 = arith.constant 56 : index
    %c0_94 = arith.constant 0 : index
    %259 = vector.load %arg11[%c56_93, %c0_94] : memref<64x192xf32, #tpu.memory_space<vmem>>, vector<8x192xf32>
    %cst_95 = arith.constant dense<0.000000e+00> : vector<8x192xf32>
    %260 = tpu.matmul %254, %24, %cst_95 {dimension_numbers = #tpu.dot_dimension_numbers<[1], [0], [0], [1], [0, 0, 1, 1], [], []>} : vector<8x64xf32>, vector<64x192xf32>, vector<8x192xf32> -> vector<8x192xf32>
    %261 = vector.extract_strided_slice %259 {offsets = [0, 0], sizes = [8, 64], strides = [1, 1]} : vector<8x192xf32> to vector<8x64xf32>
    %262 = vector.extract_strided_slice %260 {offsets = [0, 0], sizes = [8, 64], strides = [1, 1]} : vector<8x192xf32> to vector<8x64xf32>
    %263 = arith.addf %261, %262 : vector<8x64xf32>
    %264 = arith.negf %263 : vector<8x64xf32>
    %265 = math.exp %264 : vector<8x64xf32>
    %cst_96 = arith.constant 1.000000e+00 : f32
    %266 = vector.broadcast %cst_96 : f32 to vector<8x64xf32>
    %267 = arith.addf %266, %265 : vector<8x64xf32>
    %268 = arith.divf %266, %267 : vector<8x64xf32>
    %269 = vector.extract_strided_slice %259 {offsets = [0, 64], sizes = [8, 64], strides = [1, 1]} : vector<8x192xf32> to vector<8x64xf32>
    %270 = vector.extract_strided_slice %260 {offsets = [0, 64], sizes = [8, 64], strides = [1, 1]} : vector<8x192xf32> to vector<8x64xf32>
    %271 = arith.addf %269, %270 : vector<8x64xf32>
    %272 = arith.negf %271 : vector<8x64xf32>
    %273 = math.exp %272 : vector<8x64xf32>
    %cst_97 = arith.constant 1.000000e+00 : f32
    %274 = vector.broadcast %cst_97 : f32 to vector<8x64xf32>
    %275 = arith.addf %274, %273 : vector<8x64xf32>
    %276 = arith.divf %274, %275 : vector<8x64xf32>
    %277 = vector.extract_strided_slice %259 {offsets = [0, 128], sizes = [8, 64], strides = [1, 1]} : vector<8x192xf32> to vector<8x64xf32>
    %278 = vector.extract_strided_slice %260 {offsets = [0, 128], sizes = [8, 64], strides = [1, 1]} : vector<8x192xf32> to vector<8x64xf32>
    %279 = arith.addf %278, %27 : vector<8x64xf32>
    %280 = arith.mulf %268, %279 : vector<8x64xf32>
    %281 = arith.addf %277, %280 : vector<8x64xf32>
    %282 = math.tanh %281 : vector<8x64xf32>
    %cst_98 = arith.constant 1.000000e+00 : f32
    %283 = vector.broadcast %cst_98 : f32 to vector<8x64xf32>
    %284 = arith.subf %283, %276 : vector<8x64xf32>
    %285 = arith.mulf %284, %282 : vector<8x64xf32>
    %286 = arith.mulf %276, %254 : vector<8x64xf32>
    %287 = arith.addf %285, %286 : vector<8x64xf32>
    %288 = vector.extract_strided_slice %287 {offsets = [0, 0], sizes = [8, 32], strides = [1, 1]} : vector<8x64xf32> to vector<8x32xf32>
    %c56_99 = arith.constant 56 : index
    %c0_100 = arith.constant 0 : index
    %289 = vector.load %arg12[%c56_99, %c0_100] : memref<64x64xf32, #tpu.memory_space<vmem>>, vector<8x32xf32>
    tpu.vector_store %arg12[%c56_99, %c0_100], %288 {strides = array<i32>} : memref<64x64xf32, #tpu.memory_space<vmem>>, vector<8x32xf32>,
    %290 = vector.extract_strided_slice %287 {offsets = [0, 32], sizes = [8, 32], strides = [1, 1]} : vector<8x64xf32> to vector<8x32xf32>
    %c0_101 = arith.constant 0 : index
    %c32_102 = arith.constant 32 : index
    %291 = vector.load %arg12[%c0_101, %c32_102] : memref<64x64xf32, #tpu.memory_space<vmem>>, vector<8x32xf32>
    tpu.vector_store %arg12[%c0_101, %c32_102], %290 {strides = array<i32>} : memref<64x64xf32, #tpu.memory_space<vmem>>, vector<8x32xf32>,
    %c0_103 = arith.constant 0 : index
    %c0_104 = arith.constant 0 : index
    %292 = vector.load %arg12[%c0_103, %c0_104] : memref<64x64xf32, #tpu.memory_space<vmem>>, vector<64x64xf32>
    %c0_105 = arith.constant 0 : index
    %c0_106 = arith.constant 0 : index
    %293 = vector.load %arg8[%c0_105, %c0_106] : memref<64x4xf32, #tpu.memory_space<vmem>>, vector<64x4xf32>
    %cst_107 = arith.constant dense<0.000000e+00> : vector<64x4xf32>
    %294 = tpu.matmul %292, %293, %cst_107 {dimension_numbers = #tpu.dot_dimension_numbers<[1], [0], [0], [1], [0, 0, 1, 1], [], []>} : vector<64x64xf32>, vector<64x4xf32>, vector<64x4xf32> -> vector<64x4xf32>
    %c0_108 = arith.constant 0 : index
    %c0_109 = arith.constant 0 : index
    %295 = vector.load %arg9[%c0_108, %c0_109] : memref<1x4xf32, #tpu.memory_space<vmem>>, vector<1x4xf32>
    %296 = vector.broadcast %295 : vector<1x4xf32> to vector<64x4xf32>
    %297 = arith.addf %294, %296 : vector<64x4xf32>
    %c0_110 = arith.constant 0 : index
    %c0_111 = arith.constant 0 : index
    %298 = vector.load %arg10[%c0_110, %c0_111] : memref<64x4xf32, #tpu.memory_space<vmem>>, vector<64x4xf32>
    tpu.vector_store %arg10[%c0_110, %c0_111], %297 {strides = array<i32>} : memref<64x4xf32, #tpu.memory_space<vmem>>, vector<64x4xf32>,
    return
  }
}

</mosaic_0001>

<llo_original>
// kernel: decoder_future_forward.1
$region0: #{decoder_future_forward.1}
  #allocation0 [shape = 'u32[]', space=smem, size = 0x4, offset = 0x4, fixed_abs, tag = 'smem constant byte address 0x4 - core index']
  #allocation1 [shape = 'u32[144,128]{1,0:T(1,128)}', space=vmem, size = 0x12000, scoped, tag = 'internal scratch']
  #allocation2 [shape = 'f32[64,192]{1,0:T(8,128)}', space=vmem, size = 0x10000, scoped, tag = 'scratch operand']
  #allocation3 [shape = 'f32[64,64]{1,0:T(8,128)}', space=vmem, size = 0x8000, scoped, tag = 'scratch operand']
  #allocation4 [shape = 'f32[8,64]{1,0:T(8,128)}', space=vmem, size = 0x1000, scoped, tag = 'scratch operand']
  %s0 = inlined_call_operand.vmem [shape: f32[64,16], index: 0, kind: input, shape index: {}]
  %s1 = inlined_call_operand.vmem [shape: f32[2,8], index: 1, kind: input, shape index: {}]
  %s2 = inlined_call_operand.vmem [shape: f32[8,64], index: 2, kind: input, shape index: {}]
  %s3 = inlined_call_operand.vmem [shape: f32[1,64], index: 3, kind: input, shape index: {}]
  %s4 = inlined_call_operand.vmem [shape: f32[16,192], index: 4, kind: input, shape index: {}]
  %s5 = inlined_call_operand.vmem [shape: f32[1,192], index: 5, kind: input, shape index: {}]
  %s6 = inlined_call_operand.vmem [shape: f32[64,192], index: 6, kind: input, shape index: {}]
  %s7 = inlined_call_operand.vmem [shape: f32[1,64], index: 7, kind: input, shape index: {}]
  %s8 = inlined_call_operand.vmem [shape: f32[64,4], index: 8, kind: input, shape index: {}]
  %s9 = inlined_call_operand.vmem [shape: f32[1,4], index: 9, kind: input, shape index: {}]
  %s10 = inlined_call_operand.vmem [shape: f32[64,4], index: 10, kind: output, shape index: {}]
  %s11 = sld [smem:[#allocation0]]
  $region50: #{decoder_future_forward.1} parent=0
    _
  %s13 = ssub.s32 1, %s11
  %s14 = scalar_select 0, %s13, %s11
  // Predicated region
  $region2: #{decoder_future_forward.1} parent=0 // pred_check
    _
  $region3: #{decoder_future_forward.1} parent=0 // pred_check_branch
    %16 = sbr.rel (0) target = $region5
  $region4: #{decoder_future_forward.1} parent=0 // pred_region
    _
  $region5: #{decoder_future_forward.1} parent=0 // pred_fallthru
    _
  // Predicated region
  $region6: #{decoder_future_forward.1} parent=0 // pred_check
    _
  $region7: #{decoder_future_forward.1} parent=0 // pred_check_branch
    %18 = sbr.rel (0) target = $region9
  $region8: #{decoder_future_forward.1} parent=0 // pred_region
    _
  $region9: #{decoder_future_forward.1} parent=0 // pred_fallthru
    _
  // Predicated region
  $region10: #{decoder_future_forward.1} parent=0 // pred_check
    _
  $region11: #{decoder_future_forward.1} parent=0 // pred_check_branch
    %20 = sbr.rel (0) target = $region13
  $region12: #{decoder_future_forward.1} parent=0 // pred_region
    _
  $region13: #{decoder_future_forward.1} parent=0 // pred_fallthru
    _
  // Predicated region
  $region14: #{decoder_future_forward.1} parent=0 // pred_check
    _
  $region15: #{decoder_future_forward.1} parent=0 // pred_check_branch
    %22 = sbr.rel (0) target = $region17
  $region16: #{decoder_future_forward.1} parent=0 // pred_region
    _
  $region17: #{decoder_future_forward.1} parent=0 // pred_fallthru
    _
  // Predicated region
  $region18: #{decoder_future_forward.1} parent=0 // pred_check
    _
  $region19: #{decoder_future_forward.1} parent=0 // pred_check_branch
    %24 = sbr.rel (0) target = $region21
  $region20: #{decoder_future_forward.1} parent=0 // pred_region
    _
  $region21: #{decoder_future_forward.1} parent=0 // pred_fallthru
    _
  // Predicated region
  $region22: #{decoder_future_forward.1} parent=0 // pred_check
    _
  $region23: #{decoder_future_forward.1} parent=0 // pred_check_branch
    %26 = sbr.rel (0) target = $region25
  $region24: #{decoder_future_forward.1} parent=0 // pred_region
    _
  $region25: #{decoder_future_forward.1} parent=0 // pred_fallthru
    _
  // Predicated region
  $region26: #{decoder_future_forward.1} parent=0 // pred_check
    _
  $region27: #{decoder_future_forward.1} parent=0 // pred_check_branch
    %28 = sbr.rel (0) target = $region29
  $region28: #{decoder_future_forward.1} parent=0 // pred_region
    _
  $region29: #{decoder_future_forward.1} parent=0 // pred_fallthru
    _
  // Predicated region
  $region30: #{decoder_future_forward.1} parent=0 // pred_check
    _
  $region31: #{decoder_future_forward.1} parent=0 // pred_check_branch
    %30 = sbr.rel (0) target = $region33
  $region32: #{decoder_future_forward.1} parent=0 // pred_region
    _
  $region33: #{decoder_future_forward.1} parent=0 // pred_fallthru
    _
  // Predicated region
  $region34: #{decoder_future_forward.1} parent=0 // pred_check
    _
  $region35: #{decoder_future_forward.1} parent=0 // pred_check_branch
    %32 = sbr.rel (0) target = $region37
  $region36: #{decoder_future_forward.1} parent=0 // pred_region
    _
  $region37: #{decoder_future_forward.1} parent=0 // pred_fallthru
    _
  // Predicated region
  $region38: #{decoder_future_forward.1} parent=0 // pred_check
    _
  $region39: #{decoder_future_forward.1} parent=0 // pred_check_branch
    %34 = sbr.rel (0) target = $region41
  $region40: #{decoder_future_forward.1} parent=0 // pred_region
    _
  $region41: #{decoder_future_forward.1} parent=0 // pred_fallthru
    _
  %v35 = vld [vmem:[%s1] sm:$0x3]
  %v36 = vld [vmem:[%s2] sm:$0xff]
  %v37 = vld [vmem:[%s3] sm:$0x1]
  %v39 = vlaneseq
  %v40 = vshrl.u32 %v39, 7
  %v41 = vsub.s32 0, %v40
  %v42 = vrot.slane %v37, %v41
  %vm44 = vcmask 64512
  %v46 = vsel %vm44, %v35, 0
  %48 = vmatprep.subr.mxu0 0.0
  %49 = vmatpush1.msra.mxu0 %v36
  %50 = vmatprep.subr.mxu0 0.0
  %51 = vmatpush1.msra.mxu0 0.0
  %52 = vmatprep.subr.mxu0 0.0
  %53 = vmatpush1.msra.mxu0 0.0
  %54 = vmatprep.subr.mxu0 0.0
  %55 = vmatpush1.msra.mxu0 0.0
  %56 = vmatprep.subr.mxu0 0.0
  %57 = vmatpush1.msra.mxu0 0.0
  %58 = vmatprep.subr.mxu0 0.0
  %59 = vmatpush1.msra.mxu0 0.0
  %60 = vmatprep.subr.mxu0 0.0
  %61 = vmatpush1.msra.mxu0 0.0
  %62 = vmatprep.subr.mxu0 0.0
  %63 = vmatpush1.msra.mxu0 0.0
  %64 = vmatprep.subr.mxu0 0.0
  %65 = vmatpush1.msra.mxu0 0.0
  %66 = vmatprep.subr.mxu0 0.0
  %67 = vmatpush1.msra.mxu0 0.0
  %68 = vmatprep.subr.mxu0 0.0
  %69 = vmatpush1.msra.mxu0 0.0
  %70 = vmatprep.subr.mxu0 0.0
  %71 = vmatpush1.msra.mxu0 0.0
  %72 = vmatprep.subr.mxu0 0.0
  %73 = vmatpush1.msra.mxu0 0.0
  %74 = vmatprep.subr.mxu0 0.0
  %75 = vmatpush1.msra.mxu0 0.0
  %76 = vmatprep.subr.mxu0 0.0
  %77 = vmatpush1.msra.mxu0 0.0
  %78 = vmatprep.subr.mxu0 0.0
  %79 = vmatpush1.msra.mxu0 0.0
  %80 = vmatprep.subr.mxu0 0.0
  %81 = vmatpush1.msra.mxu0 0.0
  %82 = vmatprep.subr.mxu0 0.0
  %83 = vmatpush1.msra.mxu0 0.0
  %84 = vmatprep.subr.mxu0 0.0
  %85 = vmatpush1.msra.mxu0 0.0
  %86 = vmatprep.subr.mxu0 0.0
  %87 = vmatpush1.msra.mxu0 0.0
  %88 = vmatprep.subr.mxu0 0.0
  %89 = vmatpush1.msra.mxu0 0.0
  %90 = vmatprep.subr.mxu0 0.0
  %91 = vmatpush1.msra.mxu0 0.0
  %92 = vmatprep.subr.mxu0 0.0
  %93 = vmatpush1.msra.mxu0 0.0
  %94 = vmatprep.subr.mxu0 0.0
  %95 = vmatpush1.msra.mxu0 0.0
  %96 = vmatprep.subr.mxu0 0.0
  %97 = vmatpush1.msra.mxu0 0.0
  %98 = vmatprep.subr.mxu0 0.0
  %99 = vmatpush1.msra.mxu0 0.0
  %100 = vmatprep.subr.mxu0 0.0
  %101 = vmatpush1.msra.mxu0 0.0
  %102 = vmatprep.subr.mxu0 0.0
  %103 = vmatpush1.msra.mxu0 0.0
  %104 = vmatprep.subr.mxu0 0.0
  %105 = vmatpush1.msra.mxu0 0.0
  %106 = vmatprep.subr.mxu0 0.0
  %107 = vmatpush1.msra.mxu0 0.0
  %108 = vmatprep.subr.mxu0 0.0
  %109 = vmatpush1.msra.mxu0 0.0
  %110 = vmatprep.subr.mxu0 0.0
  %111 = vmatpush1.msra.mxu0 0.0
  %112 = vmatprep.mubr.f32.mxu0 0.0
  %113 = vmatmul.mubr.f32.gmra.mrb[0].mxu0 %v46
  %v114 = vpop.f32.mrb[0].mxu0
  %v115 = vadd.f32 %v42, %v114
  %v116 = vpop.f32.mrb[0].mxu0
  %117 = vdwg.mxu0
  %vm118 = vcmask 523264
  %119 = vst.msk [vmem:[#allocation4] sm:$0xff] %vm118, 0.0
  %vm120 = vcmask 253952
  %121 = vst.msk [vmem:[#allocation4] sm:$0x1] %vm120, %v115
  %123 = vrot.lane.b32.xlu0 %v115, 96
  %v124 = vpop.permute.xlu0 %123
  %126 = vst.msk [vmem:[#allocation4 + $0x1] sm:$0x1] %vm120, %v124
  %127 = vrot.lane.b32.xlu0 %v115, 32
  %v128 = vpop.permute.xlu0 %127
  %vm130 = vcmask 517377
  %131 = vst.msk [vmem:[#allocation4 - $0x1] sm:$0x2] %vm130, %v128
  %132 = vst.msk [vmem:[#allocation4] sm:$0x2] %vm130, %v115
  %v133 = vld [vmem:[#allocation4] sm:$0xff]
  %v134 = vld [vmem:[%s0] sm:$0xff]
  %v135 = vld [vmem:[%s0 + $0x8] sm:$0xff]
  %v136 = vld [vmem:[%s0 + $0x10] sm:$0xff]
  %v137 = vld [vmem:[%s0 + $0x18] sm:$0xff]
  %v138 = vld [vmem:[%s0 + $0x20] sm:$0xff]
  %v139 = vld [vmem:[%s0 + $0x28] sm:$0xff]
  %v140 = vld [vmem:[%s0 + $0x30] sm:$0xff]
  %v141 = vld [vmem:[%s0 + $0x38] sm:$0xff]
  %v142 = vld [vmem:[%s4] sm:$0xff]
  %v143 = vld [vmem:[%s4 + $0x8] sm:$0xff]
  %v144 = vld [vmem:[%s4 + $0x10] sm:$0xff]
  %v145 = vld [vmem:[%s4 + $0x18] sm:$0xff]
  %v146 = vld [vmem:[%s5] sm:$0x3]
  %v148 = vlaneseq
  %v149 = vshrl.u32 %v148, 7
  %v150 = vsub.s32 0, %v149
  %v151 = vrot.slane %v146, %v150
  %v152 = vlaneseq
  %v153 = vshrl.u32 %v152, 7
  %v154 = vsub.s32 1, %v153
  %v155 = vrot.slane %v146, %v154
  %vm158 = vcmask 130048
  %v160 = vsel %vm158, %v134, 0
  %v163 = vsel %vm158, %v135, 0
  %v166 = vsel %vm158, %v136, 0
  %v169 = vsel %vm158, %v137, 0
  %v172 = vsel %vm158, %v138, 0
  %v175 = vsel %vm158, %v139, 0
  %v178 = vsel %vm158, %v140, 0
  %v181 = vsel %vm158, %v141, 0
  %183 = vmatprep.subr.mxu0 %v143
  %184 = vmatpush1.msra.mxu0 %v142
  %185 = vmatprep.subr.mxu0 %v145
  %186 = vmatpush1.msra.mxu0 %v144
  %187 = vmatprep.subr.mxu0 0.0
  %188 = vmatpush1.msra.mxu0 0.0
  %189 = vmatprep.subr.mxu0 0.0
  %190 = vmatpush1.msra.mxu0 0.0
  %191 = vmatprep.subr.mxu0 0.0
  %192 = vmatpush1.msra.mxu0 0.0
  %193 = vmatprep.subr.mxu0 0.0
  %194 = vmatpush1.msra.mxu0 0.0
  %195 = vmatprep.subr.mxu0 0.0
  %196 = vmatpush1.msra.mxu0 0.0
  %197 = vmatprep.subr.mxu0 0.0
  %198 = vmatpush1.msra.mxu0 0.0
  %199 = vmatprep.subr.mxu0 0.0
  %200 = vmatpush1.msra.mxu0 0.0
  %201 = vmatprep.subr.mxu0 0.0
  %202 = vmatpush1.msra.mxu0 0.0
  %203 = vmatprep.subr.mxu0 0.0
  %204 = vmatpush1.msra.mxu0 0.0
  %205 = vmatprep.subr.mxu0 0.0
  %206 = vmatpush1.msra.mxu0 0.0
  %207 = vmatprep.subr.mxu0 0.0
  %208 = vmatpush1.msra.mxu0 0.0
  %209 = vmatprep.subr.mxu0 0.0
  %210 = vmatpush1.msra.mxu0 0.0
  %211 = vmatprep.subr.mxu0 0.0
  %212 = vmatpush1.msra.mxu0 0.0
  %213 = vmatprep.subr.mxu0 0.0
  %214 = vmatpush1.msra.mxu0 0.0
  %215 = vmatprep.subr.mxu0 0.0
  %216 = vmatpush1.msra.mxu0 0.0
  %217 = vmatprep.subr.mxu0 0.0
  %218 = vmatpush1.msra.mxu0 0.0
  %219 = vmatprep.subr.mxu0 0.0
  %220 = vmatpush1.msra.mxu0 0.0
  %221 = vmatprep.subr.mxu0 0.0
  %222 = vmatpush1.msra.mxu0 0.0
  %223 = vmatprep.subr.mxu0 0.0
  %224 = vmatpush1.msra.mxu0 0.0
  %225 = vmatprep.subr.mxu0 0.0
  %226 = vmatpush1.msra.mxu0 0.0
  %227 = vmatprep.subr.mxu0 0.0
  %228 = vmatpush1.msra.mxu0 0.0
  %229 = vmatprep.subr.mxu0 0.0
  %230 = vmatpush1.msra.mxu0 0.0
  %231 = vmatprep.subr.mxu0 0.0
  %232 = vmatpush1.msra.mxu0 0.0
  %233 = vmatprep.subr.mxu0 0.0
  %234 = vmatpush1.msra.mxu0 0.0
  %235 = vmatprep.subr.mxu0 0.0
  %236 = vmatpush1.msra.mxu0 0.0
  %237 = vmatprep.subr.mxu0 0.0
  %238 = vmatpush1.msra.mxu0 0.0
  %239 = vmatprep.subr.mxu0 0.0
  %240 = vmatpush1.msra.mxu0 0.0
  %241 = vmatprep.subr.mxu0 0.0
  %242 = vmatpush1.msra.mxu0 0.0
  %243 = vmatprep.subr.mxu0 0.0
  %244 = vmatpush1.msra.mxu0 0.0
  %245 = vmatprep.subr.mxu0 0.0
  %246 = vmatpush1.msra.mxu0 0.0
  %247 = vmatprep.mubr.f32.mxu0 0.0
  %248 = vmatmul.mubr.f32.gmra.mrb[0].mxu0 %v160
  %v249 = vpop.f32.mrb[0].mxu0
  %v250 = vadd.f32 %v151, %v249
  %v251 = vpop.f32.mrb[0].mxu0
  %v252 = vadd.f32 %v155, %v251
  %253 = vmatprep.mubr.f32.mxu0 0.0
  %254 = vmatmul.mubr.f32.gmra.mrb[0].mxu0 %v163
  %v255 = vpop.f32.mrb[0].mxu0
  %v256 = vadd.f32 %v151, %v255
  %v257 = vpop.f32.mrb[0].mxu0
  %v258 = vadd.f32 %v155, %v257
  %259 = vmatprep.mubr.f32.mxu0 0.0
  %260 = vmatmul.mubr.f32.gmra.mrb[0].mxu0 %v166
  %v261 = vpop.f32.mrb[0].mxu0
  %v262 = vadd.f32 %v151, %v261
  %v263 = vpop.f32.mrb[0].mxu0
  %v264 = vadd.f32 %v155, %v263
  %265 = vmatprep.mubr.f32.mxu0 0.0
  %266 = vmatmul.mubr.f32.gmra.mrb[0].mxu0 %v169
  %v267 = vpop.f32.mrb[0].mxu0
  %v268 = vadd.f32 %v151, %v267
  %v269 = vpop.f32.mrb[0].mxu0
  %v270 = vadd.f32 %v155, %v269
  %271 = vmatprep.mubr.f32.mxu0 0.0
  %272 = vmatmul.mubr.f32.gmra.mrb[0].mxu0 %v172
  %v273 = vpop.f32.mrb[0].mxu0
  %v274 = vadd.f32 %v151, %v273
  %v275 = vpop.f32.mrb[0].mxu0
  %v276 = vadd.f32 %v155, %v275
  %277 = vmatprep.mubr.f32.mxu0 0.0
  %278 = vmatmul.mubr.f32.gmra.mrb[0].mxu0 %v175
  %v279 = vpop.f32.mrb[0].mxu0
  %v280 = vadd.f32 %v151, %v279
  %v281 = vpop.f32.mrb[0].mxu0
  %v282 = vadd.f32 %v155, %v281
  %283 = vmatprep.mubr.f32.mxu0 0.0
  %284 = vmatmul.mubr.f32.gmra.mrb[0].mxu0 %v178
  %v285 = vpop.f32.mrb[0].mxu0
  %v286 = vadd.f32 %v151, %v285
  %v287 = vpop.f32.mrb[0].mxu0
  %v288 = vadd.f32 %v155, %v287
  %289 = vmatprep.mubr.f32.mxu0 0.0
  %290 = vmatmul.mubr.f32.gmra.mrb[0].mxu0 %v181
  %v291 = vpop.f32.mrb[0].mxu0
  %v292 = vadd.f32 %v151, %v291
  %v293 = vpop.f32.mrb[0].mxu0
  %v294 = vadd.f32 %v155, %v293
  %295 = vdwg.mxu0
  %296 = vst [vmem:[#allocation2] sm:$0xff] %v250
  %297 = vst.msk [vmem:[#allocation2 + $0x8] sm:$0xff] %vm118, %v252
  %298 = vst [vmem:[#allocation2 + $0x10] sm:$0xff] %v256
  %299 = vst.msk [vmem:[#allocation2 + $0x18] sm:$0xff] %vm118, %v258
  %300 = vst [vmem:[#allocation2 + $0x20] sm:$0xff] %v262
  %301 = vst.msk [vmem:[#allocation2 + $0x28] sm:$0xff] %vm118, %v264
  %302 = vst [vmem:[#allocation2 + $0x30] sm:$0xff] %v268
  %303 = vst.msk [vmem:[#allocation2 + $0x38] sm:$0xff] %vm118, %v270
  %304 = vst [vmem:[#allocation2 + $0x40] sm:$0xff] %v274
  %305 = vst.msk [vmem:[#allocation2 + $0x48] sm:$0xff] %vm118, %v276
  %306 = vst [vmem:[#allocation2 + $0x50] sm:$0xff] %v280
  %307 = vst.msk [vmem:[#allocation2 + $0x58] sm:$0xff] %vm118, %v282
  %308 = vst [vmem:[#allocation2 + $0x60] sm:$0xff] %v286
  %309 = vst.msk [vmem:[#allocation2 + $0x68] sm:$0xff] %vm118, %v288
  %310 = vst [vmem:[#allocation2 + $0x70] sm:$0xff] %v292
  %311 = vst.msk [vmem:[#allocation2 + $0x78] sm:$0xff] %vm118, %v294
  %v312 = vld [vmem:[%s6] sm:$0xff]
  %v313 = vld [vmem:[%s6 + $0x8] sm:$0xff]
  %v314 = vld [vmem:[%s6 + $0x10] sm:$0xff]
  %v315 = vld [vmem:[%s6 + $0x18] sm:$0xff]
  %v316 = vld [vmem:[%s6 + $0x20] sm:$0xff]
  %v317 = vld [vmem:[%s6 + $0x28] sm:$0xff]
  %v318 = vld [vmem:[%s6 + $0x30] sm:$0xff]
  %v319 = vld [vmem:[%s6 + $0x38] sm:$0xff]
  %v320 = vld [vmem:[%s6 + $0x40] sm:$0xff]
  %v321 = vld [vmem:[%s6 + $0x48] sm:$0xff]
  %v322 = vld [vmem:[%s6 + $0x50] sm:$0xff]
  %v323 = vld [vmem:[%s6 + $0x58] sm:$0xff]
  %v324 = vld [vmem:[%s6 + $0x60] sm:$0xff]
  %v325 = vld [vmem:[%s6 + $0x68] sm:$0xff]
  %v326 = vld [vmem:[%s6 + $0x70] sm:$0xff]
  %v327 = vld [vmem:[%s6 + $0x78] sm:$0xff]
  %v328 = vld [vmem:[%s7] sm:$0x1]
  %v330 = vlaneseq
  %v331 = vshrl.u32 %v330, 7
  %v332 = vsub.s32 0, %v331
  %v333 = vrot.slane %v328, %v332
  %v335 = vld [vmem:[#allocation2] sm:$0xff]
  %v336 = vld [vmem:[#allocation2 + $0x8] sm:$0xff]
  %v338 = vsel %vm118, %v133, 0
  %340 = vmatprep.subr.mxu0 %v313
  %341 = vmatpush1.msra.mxu0 %v312
  %342 = vmatprep.subr.mxu0 %v315
  %343 = vmatpush1.msra.mxu0 %v314
  %344 = vmatprep.subr.mxu0 %v317
  %345 = vmatpush1.msra.mxu0 %v316
  %346 = vmatprep.subr.mxu0 %v319
  %347 = vmatpush1.msra.mxu0 %v318
  %348 = vmatprep.subr.mxu0 %v321
  %349 = vmatpush1.msra.mxu0 %v320
  %350 = vmatprep.subr.mxu0 %v323
  %351 = vmatpush1.msra.mxu0 %v322
  %352 = vmatprep.subr.mxu0 %v325
  %353 = vmatpush1.msra.mxu0 %v324
  %354 = vmatprep.subr.mxu0 %v327
  %355 = vmatpush1.msra.mxu0 %v326
  %356 = vmatprep.subr.mxu0 0.0
  %357 = vmatpush1.msra.mxu0 0.0
  %358 = vmatprep.subr.mxu0 0.0
  %359 = vmatpush1.msra.mxu0 0.0
  %360 = vmatprep.subr.mxu0 0.0
  %361 = vmatpush1.msra.mxu0 0.0
  %362 = vmatprep.subr.mxu0 0.0
  %363 = vmatpush1.msra.mxu0 0.0
  %364 = vmatprep.subr.mxu0 0.0
  %365 = vmatpush1.msra.mxu0 0.0
  %366 = vmatprep.subr.mxu0 0.0
  %367 = vmatpush1.msra.mxu0 0.0
  %368 = vmatprep.subr.mxu0 0.0
  %369 = vmatpush1.msra.mxu0 0.0
  %370 = vmatprep.subr.mxu0 0.0
  %371 = vmatpush1.msra.mxu0 0.0
  %372 = vmatprep.subr.mxu0 0.0
  %373 = vmatpush1.msra.mxu0 0.0
  %374 = vmatprep.subr.mxu0 0.0
  %375 = vmatpush1.msra.mxu0 0.0
  %376 = vmatprep.subr.mxu0 0.0
  %377 = vmatpush1.msra.mxu0 0.0
  %378 = vmatprep.subr.mxu0 0.0
  %379 = vmatpush1.msra.mxu0 0.0
  %380 = vmatprep.subr.mxu0 0.0
  %381 = vmatpush1.msra.mxu0 0.0
  %382 = vmatprep.subr.mxu0 0.0
  %383 = vmatpush1.msra.mxu0 0.0
  %384 = vmatprep.subr.mxu0 0.0
  %385 = vmatpush1.msra.mxu0 0.0
  %386 = vmatprep.subr.mxu0 0.0
  %387 = vmatpush1.msra.mxu0 0.0
  %388 = vmatprep.subr.mxu0 0.0
  %389 = vmatpush1.msra.mxu0 0.0
  %390 = vmatprep.subr.mxu0 0.0
  %391 = vmatpush1.msra.mxu0 0.0
  %392 = vmatprep.subr.mxu0 0.0
  %393 = vmatpush1.msra.mxu0 0.0
  %394 = vmatprep.subr.mxu0 0.0
  %395 = vmatpush1.msra.mxu0 0.0
  %396 = vmatprep.subr.mxu0 0.0
  %397 = vmatpush1.msra.mxu0 0.0
  %398 = vmatprep.subr.mxu0 0.0
  %399 = vmatpush1.msra.mxu0 0.0
  %400 = vmatprep.subr.mxu0 0.0
  %401 = vmatpush1.msra.mxu0 0.0
  %402 = vmatprep.subr.mxu0 0.0
  %403 = vmatpush1.msra.mxu0 0.0
  %404 = vmatprep.mubr.f32.mxu0 0.0
  %405 = vmatmul.mubr.f32.gmra.mrb[0].mxu0 %v338
  %v406 = vpop.f32.mrb[0].mxu0
  %v407 = vadd.f32 0.0, %v406
  %v408 = vpop.f32.mrb[0].mxu0
  %v409 = vadd.f32 0.0, %v408
  %410 = vdwg.mxu0
  %v411 = vadd.f32 %v335, %v407
  %v412 = vxor.u32 %v411, 2147483648
  %v413 = vmul.f32 %v412, 1.442695
  %v414 = vpow.pop %v413
  %v415 = vadd.f32 %v414, 1.0
  %v416 = vrcp.pop %v415
  %v417 = vmul.f32 1.0, %v416
  %v418 = vadd.f32 %v409, %v333
  %v419 = vmul.f32 %v417, %v418
  %v420 = vadd.f32 %v336, %v419
  %v421 = vtanh.pop %v420
  %v422 = vsub.f32 1.0, %v417
  %424 = vrot.lane.b32.xlu0 %v421, 64
  %v425 = vpop.permute.xlu0 %424
  %v427 = vmul.f32 %v422, %v425
  %428 = vrot.lane.b32.xlu0 %v133, 64
  %v429 = vpop.permute.xlu0 %428
  %v431 = vmul.f32 %v417, %v429
  %v432 = vadd.f32 %v427, %v431
  %434 = vrot.lane.b32.xlu0 %v432, 64
  %v435 = vpop.permute.xlu0 %434
  %vm437 = vcmask 261120
  %438 = vst.msk [vmem:[#allocation3] sm:$0xff] %vm437, %v435
  %vm439 = vcmask 523520
  %440 = vst.msk [vmem:[#allocation3 + $0x38] sm:$0xff] %vm439, %v435
  %v441 = vld [vmem:[#allocation2 + $0x10] sm:$0xff]
  %v442 = vld [vmem:[#allocation2 + $0x18] sm:$0xff]
  %v443 = vsel %vm118, %v435, 0
  %445 = vmatprep.subr.mxu0 %v313
  %446 = vmatpush1.msra.mxu0 %v312
  %447 = vmatprep.subr.mxu0 %v315
  %448 = vmatpush1.msra.mxu0 %v314
  %449 = vmatprep.subr.mxu0 %v317
  %450 = vmatpush1.msra.mxu0 %v316
  %451 = vmatprep.subr.mxu0 %v319
  %452 = vmatpush1.msra.mxu0 %v318
  %453 = vmatprep.subr.mxu0 %v321
  %454 = vmatpush1.msra.mxu0 %v320
  %455 = vmatprep.subr.mxu0 %v323
  %456 = vmatpush1.msra.mxu0 %v322
  %457 = vmatprep.subr.mxu0 %v325
  %458 = vmatpush1.msra.mxu0 %v324
  %459 = vmatprep.subr.mxu0 %v327
  %460 = vmatpush1.msra.mxu0 %v326
  %461 = vmatprep.subr.mxu0 0.0
  %462 = vmatpush1.msra.mxu0 0.0
  %463 = vmatprep.subr.mxu0 0.0
  %464 = vmatpush1.msra.mxu0 0.0
  %465 = vmatprep.subr.mxu0 0.0
  %466 = vmatpush1.msra.mxu0 0.0
  %467 = vmatprep.subr.mxu0 0.0
  %468 = vmatpush1.msra.mxu0 0.0
  %469 = vmatprep.subr.mxu0 0.0
  %470 = vmatpush1.msra.mxu0 0.0
  %471 = vmatprep.subr.mxu0 0.0
  %472 = vmatpush1.msra.mxu0 0.0
  %473 = vmatprep.subr.mxu0 0.0
  %474 = vmatpush1.msra.mxu0 0.0
  %475 = vmatprep.subr.mxu0 0.0
  %476 = vmatpush1.msra.mxu0 0.0
  %477 = vmatprep.subr.mxu0 0.0
  %478 = vmatpush1.msra.mxu0 0.0
  %479 = vmatprep.subr.mxu0 0.0
  %480 = vmatpush1.msra.mxu0 0.0
  %481 = vmatprep.subr.mxu0 0.0
  %482 = vmatpush1.msra.mxu0 0.0
  %483 = vmatprep.subr.mxu0 0.0
  %484 = vmatpush1.msra.mxu0 0.0
  %485 = vmatprep.subr.mxu0 0.0
  %486 = vmatpush1.msra.mxu0 0.0
  %487 = vmatprep.subr.mxu0 0.0
  %488 = vmatpush1.msra.mxu0 0.0
  %489 = vmatprep.subr.mxu0 0.0
  %490 = vmatpush1.msra.mxu0 0.0
  %491 = vmatprep.subr.mxu0 0.0
  %492 = vmatpush1.msra.mxu0 0.0
  %493 = vmatprep.subr.mxu0 0.0
  %494 = vmatpush1.msra.mxu0 0.0
  %495 = vmatprep.subr.mxu0 0.0
  %496 = vmatpush1.msra.mxu0 0.0
  %497 = vmatprep.subr.mxu0 0.0
  %498 = vmatpush1.msra.mxu0 0.0
  %499 = vmatprep.subr.mxu0 0.0
  %500 = vmatpush1.msra.mxu0 0.0
  %501 = vmatprep.subr.mxu0 0.0
  %502 = vmatpush1.msra.mxu0 0.0
  %503 = vmatprep.subr.mxu0 0.0
  %504 = vmatpush1.msra.mxu0 0.0
  %505 = vmatprep.subr.mxu0 0.0
  %506 = vmatpush1.msra.mxu0 0.0
  %507 = vmatprep.subr.mxu0 0.0
  %508 = vmatpush1.msra.mxu0 0.0
  %509 = vmatprep.mubr.f32.mxu0 0.0
  %510 = vmatmul.mubr.f32.gmra.mrb[0].mxu0 %v443
  %v511 = vpop.f32.mrb[0].mxu0
  %v512 = vadd.f32 0.0, %v511
  %v513 = vpop.f32.mrb[0].mxu0
  %v514 = vadd.f32 0.0, %v513
  %515 = vdwg.mxu0
  %v516 = vadd.f32 %v441, %v512
  %v517 = vxor.u32 %v516, 2147483648
  %v518 = vmul.f32 %v517, 1.442695
  %v519 = vpow.pop %v518
  %v520 = vadd.f32 %v519, 1.0
  %v521 = vrcp.pop %v520
  %v522 = vmul.f32 1.0, %v521
  %v523 = vadd.f32 %v514, %v333
  %v524 = vmul.f32 %v522, %v523
  %v525 = vadd.f32 %v442, %v524
  %v526 = vtanh.pop %v525
  %v527 = vsub.f32 1.0, %v522
  %529 = vrot.lane.b32.xlu0 %v526, 64
  %v530 = vpop.permute.xlu0 %529
  %v532 = vmul.f32 %v527, %v530
  %v533 = vmul.f32 %v522, %v432
  %v534 = vadd.f32 %v532, %v533
  %536 = vrot.lane.b32.xlu0 %v534, 64
  %v537 = vpop.permute.xlu0 %536
  %539 = vst.msk [vmem:[#allocation3 + $0x8] sm:$0xff] %vm437, %v537
  %540 = vst.msk [vmem:[#allocation3 + $0x30] sm:$0xff] %vm439, %v537
  %v541 = vld [vmem:[#allocation2 + $0x20] sm:$0xff]
  %v542 = vld [vmem:[#allocation2 + $0x28] sm:$0xff]
  %v543 = vsel %vm118, %v537, 0
  %545 = vmatprep.subr.mxu0 %v313
  %546 = vmatpush1.msra.mxu0 %v312
  %547 = vmatprep.subr.mxu0 %v315
  %548 = vmatpush1.msra.mxu0 %v314
  %549 = vmatprep.subr.mxu0 %v317
  %550 = vmatpush1.msra.mxu0 %v316
  %551 = vmatprep.subr.mxu0 %v319
  %552 = vmatpush1.msra.mxu0 %v318
  %553 = vmatprep.subr.mxu0 %v321
  %554 = vmatpush1.msra.mxu0 %v320
  %555 = vmatprep.subr.mxu0 %v323
  %556 = vmatpush1.msra.mxu0 %v322
  %557 = vmatprep.subr.mxu0 %v325
  %558 = vmatpush1.msra.mxu0 %v324
  %559 = vmatprep.subr.mxu0 %v327
  %560 = vmatpush1.msra.mxu0 %v326
  %561 = vmatprep.subr.mxu0 0.0
  %562 = vmatpush1.msra.mxu0 0.0
  %563 = vmatprep.subr.mxu0 0.0
  %564 = vmatpush1.msra.mxu0 0.0
  %565 = vmatprep.subr.mxu0 0.0
  %566 = vmatpush1.msra.mxu0 0.0
  %567 = vmatprep.subr.mxu0 0.0
  %568 = vmatpush1.msra.mxu0 0.0
  %569 = vmatprep.subr.mxu0 0.0
  %570 = vmatpush1.msra.mxu0 0.0
  %571 = vmatprep.subr.mxu0 0.0
  %572 = vmatpush1.msra.mxu0 0.0
  %573 = vmatprep.subr.mxu0 0.0
  %574 = vmatpush1.msra.mxu0 0.0
  %575 = vmatprep.subr.mxu0 0.0
  %576 = vmatpush1.msra.mxu0 0.0
  %577 = vmatprep.subr.mxu0 0.0
  %578 = vmatpush1.msra.mxu0 0.0
  %579 = vmatprep.subr.mxu0 0.0
  %580 = vmatpush1.msra.mxu0 0.0
  %581 = vmatprep.subr.mxu0 0.0
  %582 = vmatpush1.msra.mxu0 0.0
  %583 = vmatprep.subr.mxu0 0.0
  %584 = vmatpush1.msra.mxu0 0.0
  %585 = vmatprep.subr.mxu0 0.0
  %586 = vmatpush1.msra.mxu0 0.0
  %587 = vmatprep.subr.mxu0 0.0
  %588 = vmatpush1.msra.mxu0 0.0
  %589 = vmatprep.subr.mxu0 0.0
  %590 = vmatpush1.msra.mxu0 0.0
  %591 = vmatprep.subr.mxu0 0.0
  %592 = vmatpush1.msra.mxu0 0.0
  %593 = vmatprep.subr.mxu0 0.0
  %594 = vmatpush1.msra.mxu0 0.0
  %595 = vmatprep.subr.mxu0 0.0
  %596 = vmatpush1.msra.mxu0 0.0
  %597 = vmatprep.subr.mxu0 0.0
  %598 = vmatpush1.msra.mxu0 0.0
  %599 = vmatprep.subr.mxu0 0.0
  %600 = vmatpush1.msra.mxu0 0.0
  %601 = vmatprep.subr.mxu0 0.0
  %602 = vmatpush1.msra.mxu0 0.0
  %603 = vmatprep.subr.mxu0 0.0
  %604 = vmatpush1.msra.mxu0 0.0
  %605 = vmatprep.subr.mxu0 0.0
  %606 = vmatpush1.msra.mxu0 0.0
  %607 = vmatprep.subr.mxu0 0.0
  %608 = vmatpush1.msra.mxu0 0.0
  %609 = vmatprep.mubr.f32.mxu0 0.0
  %610 = vmatmul.mubr.f32.gmra.mrb[0].mxu0 %v543
  %v611 = vpop.f32.mrb[0].mxu0
  %v612 = vadd.f32 0.0, %v611
  %v613 = vpop.f32.mrb[0].mxu0
  %v614 = vadd.f32 0.0, %v613
  %615 = vdwg.mxu0
  %v616 = vadd.f32 %v541, %v612
  %v617 = vxor.u32 %v616, 2147483648
  %v618 = vmul.f32 %v617, 1.442695
  %v619 = vpow.pop %v618
  %v620 = vadd.f32 %v619, 1.0
  %v621 = vrcp.pop %v620
  %v622 = vmul.f32 1.0, %v621
  %v623 = vadd.f32 %v614, %v333
  %v624 = vmul.f32 %v622, %v623
  %v625 = vadd.f32 %v542, %v624
  %v626 = vtanh.pop %v625
  %v627 = vsub.f32 1.0, %v622
  %629 = vrot.lane.b32.xlu0 %v626, 64
  %v630 = vpop.permute.xlu0 %629
  %v632 = vmul.f32 %v627, %v630
  %v633 = vmul.f32 %v622, %v534
  %v634 = vadd.f32 %v632, %v633
  %636 = vrot.lane.b32.xlu0 %v634, 64
  %v637 = vpop.permute.xlu0 %636
  %639 = vst.msk [vmem:[#allocation3 + $0x10] sm:$0xff] %vm437, %v637
  %640 = vst.msk [vmem:[#allocation3 + $0x28] sm:$0xff] %vm439, %v637
  %v641 = vld [vmem:[#allocation2 + $0x30] sm:$0xff]
  %v642 = vld [vmem:[#allocation2 + $0x38] sm:$0xff]
  %v643 = vsel %vm118, %v637, 0
  %645 = vmatprep.subr.mxu0 %v313
  %646 = vmatpush1.msra.mxu0 %v312
  %647 = vmatprep.subr.mxu0 %v315
  %648 = vmatpush1.msra.mxu0 %v314
  %649 = vmatprep.subr.mxu0 %v317
  %650 = vmatpush1.msra.mxu0 %v316
  %651 = vmatprep.subr.mxu0 %v319
  %652 = vmatpush1.msra.mxu0 %v318
  %653 = vmatprep.subr.mxu0 %v321
  %654 = vmatpush1.msra.mxu0 %v320
  %655 = vmatprep.subr.mxu0 %v323
  %656 = vmatpush1.msra.mxu0 %v322
  %657 = vmatprep.subr.mxu0 %v325
  %658 = vmatpush1.msra.mxu0 %v324
  %659 = vmatprep.subr.mxu0 %v327
  %660 = vmatpush1.msra.mxu0 %v326
  %661 = vmatprep.subr.mxu0 0.0
  %662 = vmatpush1.msra.mxu0 0.0
  %663 = vmatprep.subr.mxu0 0.0
  %664 = vmatpush1.msra.mxu0 0.0
  %665 = vmatprep.subr.mxu0 0.0
  %666 = vmatpush1.msra.mxu0 0.0
  %667 = vmatprep.subr.mxu0 0.0
  %668 = vmatpush1.msra.mxu0 0.0
  %669 = vmatprep.subr.mxu0 0.0
  %670 = vmatpush1.msra.mxu0 0.0
  %671 = vmatprep.subr.mxu0 0.0
  %672 = vmatpush1.msra.mxu0 0.0
  %673 = vmatprep.subr.mxu0 0.0
  %674 = vmatpush1.msra.mxu0 0.0
  %675 = vmatprep.subr.mxu0 0.0
  %676 = vmatpush1.msra.mxu0 0.0
  %677 = vmatprep.subr.mxu0 0.0
  %678 = vmatpush1.msra.mxu0 0.0
  %679 = vmatprep.subr.mxu0 0.0
  %680 = vmatpush1.msra.mxu0 0.0
  %681 = vmatprep.subr.mxu0 0.0
  %682 = vmatpush1.msra.mxu0 0.0
  %683 = vmatprep.subr.mxu0 0.0
  %684 = vmatpush1.msra.mxu0 0.0
  %685 = vmatprep.subr.mxu0 0.0
  %686 = vmatpush1.msra.mxu0 0.0
  %687 = vmatprep.subr.mxu0 0.0
  %688 = vmatpush1.msra.mxu0 0.0
  %689 = vmatprep.subr.mxu0 0.0
  %690 = vmatpush1.msra.mxu0 0.0
  %691 = vmatprep.subr.mxu0 0.0
  %692 = vmatpush1.msra.mxu0 0.0
  %693 = vmatprep.subr.mxu0 0.0
  %694 = vmatpush1.msra.mxu0 0.0
  %695 = vmatprep.subr.mxu0 0.0
  %696 = vmatpush1.msra.mxu0 0.0
  %697 = vmatprep.subr.mxu0 0.0
  %698 = vmatpush1.msra.mxu0 0.0
  %699 = vmatprep.subr.mxu0 0.0
  %700 = vmatpush1.msra.mxu0 0.0
  %701 = vmatprep.subr.mxu0 0.0
  %702 = vmatpush1.msra.mxu0 0.0
  %703 = vmatprep.subr.mxu0 0.0
  %704 = vmatpush1.msra.mxu0 0.0
  %705 = vmatprep.subr.mxu0 0.0
  %706 = vmatpush1.msra.mxu0 0.0
  %707 = vmatprep.subr.mxu0 0.0
  %708 = vmatpush1.msra.mxu0 0.0
  %709 = vmatprep.mubr.f32.mxu0 0.0
  %710 = vmatmul.mubr.f32.gmra.mrb[0].mxu0 %v643
  %v711 = vpop.f32.mrb[0].mxu0
  %v712 = vadd.f32 0.0, %v711
  %v713 = vpop.f32.mrb[0].mxu0
  %v714 = vadd.f32 0.0, %v713
  %715 = vdwg.mxu0
  %v716 = vadd.f32 %v641, %v712
  %v717 = vxor.u32 %v716, 2147483648
  %v718 = vmul.f32 %v717, 1.442695
  %v719 = vpow.pop %v718
  %v720 = vadd.f32 %v719, 1.0
  %v721 = vrcp.pop %v720
  %v722 = vmul.f32 1.0, %v721
  %v723 = vadd.f32 %v714, %v333
  %v724 = vmul.f32 %v722, %v723
  %v725 = vadd.f32 %v642, %v724
  %v726 = vtanh.pop %v725
  %v727 = vsub.f32 1.0, %v722
  %729 = vrot.lane.b32.xlu0 %v726, 64
  %v730 = vpop.permute.xlu0 %729
  %v732 = vmul.f32 %v727, %v730
  %v733 = vmul.f32 %v722, %v634
  %v734 = vadd.f32 %v732, %v733
  %736 = vrot.lane.b32.xlu0 %v734, 64
  %v737 = vpop.permute.xlu0 %736
  %739 = vst.msk [vmem:[#allocation3 + $0x18] sm:$0xff] %vm437, %v737
  %740 = vst.msk [vmem:[#allocation3 + $0x20] sm:$0xff] %vm439, %v737
  %v741 = vld [vmem:[#allocation2 + $0x40] sm:$0xff]
  %v742 = vld [vmem:[#allocation2 + $0x48] sm:$0xff]
  %v743 = vsel %vm118, %v737, 0
  %745 = vmatprep.subr.mxu0 %v313
  %746 = vmatpush1.msra.mxu0 %v312
  %747 = vmatprep.subr.mxu0 %v315
  %748 = vmatpush1.msra.mxu0 %v314
  %749 = vmatprep.subr.mxu0 %v317
  %750 = vmatpush1.msra.mxu0 %v316
  %751 = vmatprep.subr.mxu0 %v319
  %752 = vmatpush1.msra.mxu0 %v318
  %753 = vmatprep.subr.mxu0 %v321
  %754 = vmatpush1.msra.mxu0 %v320
  %755 = vmatprep.subr.mxu0 %v323
  %756 = vmatpush1.msra.mxu0 %v322
  %757 = vmatprep.subr.mxu0 %v325
  %758 = vmatpush1.msra.mxu0 %v324
  %759 = vmatprep.subr.mxu0 %v327
  %760 = vmatpush1.msra.mxu0 %v326
  %761 = vmatprep.subr.mxu0 0.0
  %762 = vmatpush1.msra.mxu0 0.0
  %763 = vmatprep.subr.mxu0 0.0
  %764 = vmatpush1.msra.mxu0 0.0
  %765 = vmatprep.subr.mxu0 0.0
  %766 = vmatpush1.msra.mxu0 0.0
  %767 = vmatprep.subr.mxu0 0.0
  %768 = vmatpush1.msra.mxu0 0.0
  %769 = vmatprep.subr.mxu0 0.0
  %770 = vmatpush1.msra.mxu0 0.0
  %771 = vmatprep.subr.mxu0 0.0
  %772 = vmatpush1.msra.mxu0 0.0
  %773 = vmatprep.subr.mxu0 0.0
  %774 = vmatpush1.msra.mxu0 0.0
  %775 = vmatprep.subr.mxu0 0.0
  %776 = vmatpush1.msra.mxu0 0.0
  %777 = vmatprep.subr.mxu0 0.0
  %778 = vmatpush1.msra.mxu0 0.0
  %779 = vmatprep.subr.mxu0 0.0
  %780 = vmatpush1.msra.mxu0 0.0
  %781 = vmatprep.subr.mxu0 0.0
  %782 = vmatpush1.msra.mxu0 0.0
  %783 = vmatprep.subr.mxu0 0.0
  %784 = vmatpush1.msra.mxu0 0.0
  %785 = vmatprep.subr.mxu0 0.0
  %786 = vmatpush1.msra.mxu0 0.0
  %787 = vmatprep.subr.mxu0 0.0
  %788 = vmatpush1.msra.mxu0 0.0
  %789 = vmatprep.subr.mxu0 0.0
  %790 = vmatpush1.msra.mxu0 0.0
  %791 = vmatprep.subr.mxu0 0.0
  %792 = vmatpush1.msra.mxu0 0.0
  %793 = vmatprep.subr.mxu0 0.0
  %794 = vmatpush1.msra.mxu0 0.0
  %795 = vmatprep.subr.mxu0 0.0
  %796 = vmatpush1.msra.mxu0 0.0
  %797 = vmatprep.subr.mxu0 0.0
  %798 = vmatpush1.msra.mxu0 0.0
  %799 = vmatprep.subr.mxu0 0.0
  %800 = vmatpush1.msra.mxu0 0.0
  %801 = vmatprep.subr.mxu0 0.0
  %802 = vmatpush1.msra.mxu0 0.0
  %803 = vmatprep.subr.mxu0 0.0
  %804 = vmatpush1.msra.mxu0 0.0
  %805 = vmatprep.subr.mxu0 0.0
  %806 = vmatpush1.msra.mxu0 0.0
  %807 = vmatprep.subr.mxu0 0.0
  %808 = vmatpush1.msra.mxu0 0.0
  %809 = vmatprep.mubr.f32.mxu0 0.0
  %810 = vmatmul.mubr.f32.gmra.mrb[0].mxu0 %v743
  %v811 = vpop.f32.mrb[0].mxu0
  %v812 = vadd.f32 0.0, %v811
  %v813 = vpop.f32.mrb[0].mxu0
  %v814 = vadd.f32 0.0, %v813
  %815 = vdwg.mxu0
  %v816 = vadd.f32 %v741, %v812
  %v817 = vxor.u32 %v816, 2147483648
  %v818 = vmul.f32 %v817, 1.442695
  %v819 = vpow.pop %v818
  %v820 = vadd.f32 %v819, 1.0
  %v821 = vrcp.pop %v820
  %v822 = vmul.f32 1.0, %v821
  %v823 = vadd.f32 %v814, %v333
  %v824 = vmul.f32 %v822, %v823
  %v825 = vadd.f32 %v742, %v824
  %v826 = vtanh.pop %v825
  %v827 = vsub.f32 1.0, %v822
  %829 = vrot.lane.b32.xlu0 %v826, 64
  %v830 = vpop.permute.xlu0 %829
  %v832 = vmul.f32 %v827, %v830
  %v833 = vmul.f32 %v822, %v734
  %v834 = vadd.f32 %v832, %v833
  %836 = vrot.lane.b32.xlu0 %v834, 64
  %v837 = vpop.permute.xlu0 %836
  %839 = vst.msk [vmem:[#allocation3 + $0x20] sm:$0xff] %vm437, %v837
  %840 = vst.msk [vmem:[#allocation3 + $0x18] sm:$0xff] %vm439, %v837
  %v841 = vld [vmem:[#allocation2 + $0x50] sm:$0xff]
  %v842 = vld [vmem:[#allocation2 + $0x58] sm:$0xff]
  %v843 = vsel %vm118, %v837, 0
  %845 = vmatprep.subr.mxu0 %v313
  %846 = vmatpush1.msra.mxu0 %v312
  %847 = vmatprep.subr.mxu0 %v315
  %848 = vmatpush1.msra.mxu0 %v314
  %849 = vmatprep.subr.mxu0 %v317
  %850 = vmatpush1.msra.mxu0 %v316
  %851 = vmatprep.subr.mxu0 %v319
  %852 = vmatpush1.msra.mxu0 %v318
  %853 = vmatprep.subr.mxu0 %v321
  %854 = vmatpush1.msra.mxu0 %v320
  %855 = vmatprep.subr.mxu0 %v323
  %856 = vmatpush1.msra.mxu0 %v322
  %857 = vmatprep.subr.mxu0 %v325
  %858 = vmatpush1.msra.mxu0 %v324
  %859 = vmatprep.subr.mxu0 %v327
  %860 = vmatpush1.msra.mxu0 %v326
  %861 = vmatprep.subr.mxu0 0.0
  %862 = vmatpush1.msra.mxu0 0.0
  %863 = vmatprep.subr.mxu0 0.0
  %864 = vmatpush1.msra.mxu0 0.0
  %865 = vmatprep.subr.mxu0 0.0
  %866 = vmatpush1.msra.mxu0 0.0
  %867 = vmatprep.subr.mxu0 0.0
  %868 = vmatpush1.msra.mxu0 0.0
  %869 = vmatprep.subr.mxu0 0.0
  %870 = vmatpush1.msra.mxu0 0.0
  %871 = vmatprep.subr.mxu0 0.0
  %872 = vmatpush1.msra.mxu0 0.0
  %873 = vmatprep.subr.mxu0 0.0
  %874 = vmatpush1.msra.mxu0 0.0
  %875 = vmatprep.subr.mxu0 0.0
  %876 = vmatpush1.msra.mxu0 0.0
  %877 = vmatprep.subr.mxu0 0.0
  %878 = vmatpush1.msra.mxu0 0.0
  %879 = vmatprep.subr.mxu0 0.0
  %880 = vmatpush1.msra.mxu0 0.0
  %881 = vmatprep.subr.mxu0 0.0
  %882 = vmatpush1.msra.mxu0 0.0
  %883 = vmatprep.subr.mxu0 0.0
  %884 = vmatpush1.msra.mxu0 0.0
  %885 = vmatprep.subr.mxu0 0.0
  %886 = vmatpush1.msra.mxu0 0.0
  %887 = vmatprep.subr.mxu0 0.0
  %888 = vmatpush1.msra.mxu0 0.0
  %889 = vmatprep.subr.mxu0 0.0
  %890 = vmatpush1.msra.mxu0 0.0
  %891 = vmatprep.subr.mxu0 0.0
  %892 = vmatpush1.msra.mxu0 0.0
  %893 = vmatprep.subr.mxu0 0.0
  %894 = vmatpush1.msra.mxu0 0.0
  %895 = vmatprep.subr.mxu0 0.0
  %896 = vmatpush1.msra.mxu0 0.0
  %897 = vmatprep.subr.mxu0 0.0
  %898 = vmatpush1.msra.mxu0 0.0
  %899 = vmatprep.subr.mxu0 0.0
  %900 = vmatpush1.msra.mxu0 0.0
  %901 = vmatprep.subr.mxu0 0.0
  %902 = vmatpush1.msra.mxu0 0.0
  %903 = vmatprep.subr.mxu0 0.0
  %904 = vmatpush1.msra.mxu0 0.0
  %905 = vmatprep.subr.mxu0 0.0
  %906 = vmatpush1.msra.mxu0 0.0
  %907 = vmatprep.subr.mxu0 0.0
  %908 = vmatpush1.msra.mxu0 0.0
  %909 = vmatprep.mubr.f32.mxu0 0.0
  %910 = vmatmul.mubr.f32.gmra.mrb[0].mxu0 %v843
  %v911 = vpop.f32.mrb[0].mxu0
  %v912 = vadd.f32 0.0, %v911
  %v913 = vpop.f32.mrb[0].mxu0
  %v914 = vadd.f32 0.0, %v913
  %915 = vdwg.mxu0
  %v916 = vadd.f32 %v841, %v912
  %v917 = vxor.u32 %v916, 2147483648
  %v918 = vmul.f32 %v917, 1.442695
  %v919 = vpow.pop %v918
  %v920 = vadd.f32 %v919, 1.0
  %v921 = vrcp.pop %v920
  %v922 = vmul.f32 1.0, %v921
  %v923 = vadd.f32 %v914, %v333
  %v924 = vmul.f32 %v922, %v923
  %v925 = vadd.f32 %v842, %v924
  %v926 = vtanh.pop %v925
  %v927 = vsub.f32 1.0, %v922
  %929 = vrot.lane.b32.xlu0 %v926, 64
  %v930 = vpop.permute.xlu0 %929
  %v932 = vmul.f32 %v927, %v930
  %v933 = vmul.f32 %v922, %v834
  %v934 = vadd.f32 %v932, %v933
  %936 = vrot.lane.b32.xlu0 %v934, 64
  %v937 = vpop.permute.xlu0 %936
  %939 = vst.msk [vmem:[#allocation3 + $0x28] sm:$0xff] %vm437, %v937
  %940 = vst.msk [vmem:[#allocation3 + $0x10] sm:$0xff] %vm439, %v937
  %v941 = vld [vmem:[#allocation2 + $0x60] sm:$0xff]
  %v942 = vld [vmem:[#allocation2 + $0x68] sm:$0xff]
  %v943 = vsel %vm118, %v937, 0
  %945 = vmatprep.subr.mxu0 %v313
  %946 = vmatpush1.msra.mxu0 %v312
  %947 = vmatprep.subr.mxu0 %v315
  %948 = vmatpush1.msra.mxu0 %v314
  %949 = vmatprep.subr.mxu0 %v317
  %950 = vmatpush1.msra.mxu0 %v316
  %951 = vmatprep.subr.mxu0 %v319
  %952 = vmatpush1.msra.mxu0 %v318
  %953 = vmatprep.subr.mxu0 %v321
  %954 = vmatpush1.msra.mxu0 %v320
  %955 = vmatprep.subr.mxu0 %v323
  %956 = vmatpush1.msra.mxu0 %v322
  %957 = vmatprep.subr.mxu0 %v325
  %958 = vmatpush1.msra.mxu0 %v324
  %959 = vmatprep.subr.mxu0 %v327
  %960 = vmatpush1.msra.mxu0 %v326
  %961 = vmatprep.subr.mxu0 0.0
  %962 = vmatpush1.msra.mxu0 0.0
  %963 = vmatprep.subr.mxu0 0.0
  %964 = vmatpush1.msra.mxu0 0.0
  %965 = vmatprep.subr.mxu0 0.0
  %966 = vmatpush1.msra.mxu0 0.0
  %967 = vmatprep.subr.mxu0 0.0
  %968 = vmatpush1.msra.mxu0 0.0
  %969 = vmatprep.subr.mxu0 0.0
  %970 = vmatpush1.msra.mxu0 0.0
  %971 = vmatprep.subr.mxu0 0.0
  %972 = vmatpush1.msra.mxu0 0.0
  %973 = vmatprep.subr.mxu0 0.0
  %974 = vmatpush1.msra.mxu0 0.0
  %975 = vmatprep.subr.mxu0 0.0
  %976 = vmatpush1.msra.mxu0 0.0
  %977 = vmatprep.subr.mxu0 0.0
  %978 = vmatpush1.msra.mxu0 0.0
  %979 = vmatprep.subr.mxu0 0.0
  %980 = vmatpush1.msra.mxu0 0.0
  %981 = vmatprep.subr.mxu0 0.0
  %982 = vmatpush1.msra.mxu0 0.0
  %983 = vmatprep.subr.mxu0 0.0
  %984 = vmatpush1.msra.mxu0 0.0
  %985 = vmatprep.subr.mxu0 0.0
  %986 = vmatpush1.msra.mxu0 0.0
  %987 = vmatprep.subr.mxu0 0.0
  %988 = vmatpush1.msra.mxu0 0.0
  %989 = vmatprep.subr.mxu0 0.0
  %990 = vmatpush1.msra.mxu0 0.0
  %991 = vmatprep.subr.mxu0 0.0
  %992 = vmatpush1.msra.mxu0 0.0
  %993 = vmatprep.subr.mxu0 0.0
  %994 = vmatpush1.msra.mxu0 0.0
  %995 = vmatprep.subr.mxu0 0.0
  %996 = vmatpush1.msra.mxu0 0.0
  %997 = vmatprep.subr.mxu0 0.0
  %998 = vmatpush1.msra.mxu0 0.0
  %999 = vmatprep.subr.mxu0 0.0
  %1000 = vmatpush1.msra.mxu0 0.0
  %1001 = vmatprep.subr.mxu0 0.0
  %1002 = vmatpush1.msra.mxu0 0.0
  %1003 = vmatprep.subr.mxu0 0.0
  %1004 = vmatpush1.msra.mxu0 0.0
  %1005 = vmatprep.subr.mxu0 0.0
  %1006 = vmatpush1.msra.mxu0 0.0
  %1007 = vmatprep.subr.mxu0 0.0
  %1008 = vmatpush1.msra.mxu0 0.0
  %1009 = vmatprep.mubr.f32.mxu0 0.0
  %1010 = vmatmul.mubr.f32.gmra.mrb[0].mxu0 %v943
  %v1011 = vpop.f32.mrb[0].mxu0
  %v1012 = vadd.f32 0.0, %v1011
  %v1013 = vpop.f32.mrb[0].mxu0
  %v1014 = vadd.f32 0.0, %v1013
  %1015 = vdwg.mxu0
  %v1016 = vadd.f32 %v941, %v1012
  %v1017 = vxor.u32 %v1016, 2147483648
  %v1018 = vmul.f32 %v1017, 1.442695
  %v1019 = vpow.pop %v1018
  %v1020 = vadd.f32 %v1019, 1.0
  %v1021 = vrcp.pop %v1020
  %v1022 = vmul.f32 1.0, %v1021
  %v1023 = vadd.f32 %v1014, %v333
  %v1024 = vmul.f32 %v1022, %v1023
  %v1025 = vadd.f32 %v942, %v1024
  %v1026 = vtanh.pop %v1025
  %v1027 = vsub.f32 1.0, %v1022
  %1029 = vrot.lane.b32.xlu0 %v1026, 64
  %v1030 = vpop.permute.xlu0 %1029
  %v1032 = vmul.f32 %v1027, %v1030
  %v1033 = vmul.f32 %v1022, %v934
  %v1034 = vadd.f32 %v1032, %v1033
  %1036 = vrot.lane.b32.xlu0 %v1034, 64
  %v1037 = vpop.permute.xlu0 %1036
  %1039 = vst.msk [vmem:[#allocation3 + $0x30] sm:$0xff] %vm437, %v1037
  %1040 = vst.msk [vmem:[#allocation3 + $0x8] sm:$0xff] %vm439, %v1037
  %v1041 = vld [vmem:[#allocation2 + $0x70] sm:$0xff]
  %v1042 = vld [vmem:[#allocation2 + $0x78] sm:$0xff]
  %v1043 = vsel %vm118, %v1037, 0
  %1045 = vmatprep.subr.mxu0 %v313
  %1046 = vmatpush1.msra.mxu0 %v312
  %1047 = vmatprep.subr.mxu0 %v315
  %1048 = vmatpush1.msra.mxu0 %v314
  %1049 = vmatprep.subr.mxu0 %v317
  %1050 = vmatpush1.msra.mxu0 %v316
  %1051 = vmatprep.subr.mxu0 %v319
  %1052 = vmatpush1.msra.mxu0 %v318
  %1053 = vmatprep.subr.mxu0 %v321
  %1054 = vmatpush1.msra.mxu0 %v320
  %1055 = vmatprep.subr.mxu0 %v323
  %1056 = vmatpush1.msra.mxu0 %v322
  %1057 = vmatprep.subr.mxu0 %v325
  %1058 = vmatpush1.msra.mxu0 %v324
  %1059 = vmatprep.subr.mxu0 %v327
  %1060 = vmatpush1.msra.mxu0 %v326
  %1061 = vmatprep.subr.mxu0 0.0
  %1062 = vmatpush1.msra.mxu0 0.0
  %1063 = vmatprep.subr.mxu0 0.0
  %1064 = vmatpush1.msra.mxu0 0.0
  %1065 = vmatprep.subr.mxu0 0.0
  %1066 = vmatpush1.msra.mxu0 0.0
  %1067 = vmatprep.subr.mxu0 0.0
  %1068 = vmatpush1.msra.mxu0 0.0
  %1069 = vmatprep.subr.mxu0 0.0
  %1070 = vmatpush1.msra.mxu0 0.0
  %1071 = vmatprep.subr.mxu0 0.0
  %1072 = vmatpush1.msra.mxu0 0.0
  %1073 = vmatprep.subr.mxu0 0.0
  %1074 = vmatpush1.msra.mxu0 0.0
  %1075 = vmatprep.subr.mxu0 0.0
  %1076 = vmatpush1.msra.mxu0 0.0
  %1077 = vmatprep.subr.mxu0 0.0
  %1078 = vmatpush1.msra.mxu0 0.0
  %1079 = vmatprep.subr.mxu0 0.0
  %1080 = vmatpush1.msra.mxu0 0.0
  %1081 = vmatprep.subr.mxu0 0.0
  %1082 = vmatpush1.msra.mxu0 0.0
  %1083 = vmatprep.subr.mxu0 0.0
  %1084 = vmatpush1.msra.mxu0 0.0
  %1085 = vmatprep.subr.mxu0 0.0
  %1086 = vmatpush1.msra.mxu0 0.0
  %1087 = vmatprep.subr.mxu0 0.0
  %1088 = vmatpush1.msra.mxu0 0.0
  %1089 = vmatprep.subr.mxu0 0.0
  %1090 = vmatpush1.msra.mxu0 0.0
  %1091 = vmatprep.subr.mxu0 0.0
  %1092 = vmatpush1.msra.mxu0 0.0
  %1093 = vmatprep.subr.mxu0 0.0
  %1094 = vmatpush1.msra.mxu0 0.0
  %1095 = vmatprep.subr.mxu0 0.0
  %1096 = vmatpush1.msra.mxu0 0.0
  %1097 = vmatprep.subr.mxu0 0.0
  %1098 = vmatpush1.msra.mxu0 0.0
  %1099 = vmatprep.subr.mxu0 0.0
  %1100 = vmatpush1.msra.mxu0 0.0
  %1101 = vmatprep.subr.mxu0 0.0
  %1102 = vmatpush1.msra.mxu0 0.0
  %1103 = vmatprep.subr.mxu0 0.0
  %1104 = vmatpush1.msra.mxu0 0.0
  %1105 = vmatprep.subr.mxu0 0.0
  %1106 = vmatpush1.msra.mxu0 0.0
  %1107 = vmatprep.subr.mxu0 0.0
  %1108 = vmatpush1.msra.mxu0 0.0
  %1109 = vmatprep.mubr.f32.mxu0 0.0
  %1110 = vmatmul.mubr.f32.gmra.mrb[0].mxu0 %v1043
  %v1111 = vpop.f32.mrb[0].mxu0
  %v1112 = vadd.f32 0.0, %v1111
  %v1113 = vpop.f32.mrb[0].mxu0
  %v1114 = vadd.f32 0.0, %v1113
  %1115 = vdwg.mxu0
  %v1116 = vadd.f32 %v1041, %v1112
  %v1117 = vxor.u32 %v1116, 2147483648
  %v1118 = vmul.f32 %v1117, 1.442695
  %v1119 = vpow.pop %v1118
  %v1120 = vadd.f32 %v1119, 1.0
  %v1121 = vrcp.pop %v1120
  %v1122 = vmul.f32 1.0, %v1121
  %v1123 = vadd.f32 %v1114, %v333
  %v1124 = vmul.f32 %v1122, %v1123
  %v1125 = vadd.f32 %v1042, %v1124
  %v1126 = vtanh.pop %v1125
  %v1127 = vsub.f32 1.0, %v1122
  %1129 = vrot.lane.b32.xlu0 %v1126, 64
  %v1130 = vpop.permute.xlu0 %1129
  %v1132 = vmul.f32 %v1127, %v1130
  %v1133 = vmul.f32 %v1122, %v1034
  %v1134 = vadd.f32 %v1132, %v1133
  %1136 = vrot.lane.b32.xlu0 %v1134, 64
  %v1137 = vpop.permute.xlu0 %1136
  %1139 = vst.msk [vmem:[#allocation3 + $0x38] sm:$0xff] %vm437, %v1137
  %1140 = vst.msk [vmem:[#allocation3] sm:$0xff] %vm439, %v1137
  %v1141 = vld [vmem:[#allocation3] sm:$0xff]
  %v1142 = vld [vmem:[#allocation3 + $0x8] sm:$0xff]
  %v1143 = vld [vmem:[#allocation3 + $0x10] sm:$0xff]
  %v1144 = vld [vmem:[#allocation3 + $0x18] sm:$0xff]
  %v1145 = vld [vmem:[#allocation3 + $0x20] sm:$0xff]
  %v1146 = vld [vmem:[#allocation3 + $0x28] sm:$0xff]
  %v1147 = vld [vmem:[#allocation3 + $0x30] sm:$0xff]
  %v1148 = vld [vmem:[#allocation3 + $0x38] sm:$0xff]
  %v1149 = vld [vmem:[%s8] sm:$0xff]
  %v1150 = vld [vmem:[%s8 + $0x8] sm:$0xff]
  %v1151 = vld [vmem:[%s8 + $0x10] sm:$0xff]
  %v1152 = vld [vmem:[%s8 + $0x18] sm:$0xff]
  %v1153 = vld [vmem:[%s8 + $0x20] sm:$0xff]
  %v1154 = vld [vmem:[%s8 + $0x28] sm:$0xff]
  %v1155 = vld [vmem:[%s8 + $0x30] sm:$0xff]
  %v1156 = vld [vmem:[%s8 + $0x38] sm:$0xff]
  %v1157 = vld [vmem:[%s9] sm:$0x1]
  %v1159 = vlaneseq
  %v1160 = vshrl.u32 %v1159, 7
  %v1161 = vsub.s32 0, %v1160
  %v1162 = vrot.slane %v1157, %v1161
  %v1165 = vsel %vm118, %v1141, 0
  %v1168 = vsel %vm118, %v1142, 0
  %v1171 = vsel %vm118, %v1143, 0
  %v1174 = vsel %vm118, %v1144, 0
  %v1177 = vsel %vm118, %v1145, 0
  %v1180 = vsel %vm118, %v1146, 0
  %v1183 = vsel %vm118, %v1147, 0
  %v1186 = vsel %vm118, %v1148, 0
  %1188 = vmatprep.subr.mxu0 0.0
  %1189 = vmatpush1.msra.mxu0 %v1149
  %1190 = vmatprep.subr.mxu0 0.0
  %1191 = vmatpush1.msra.mxu0 %v1150
  %1192 = vmatprep.subr.mxu0 0.0
  %1193 = vmatpush1.msra.mxu0 %v1151
  %1194 = vmatprep.subr.mxu0 0.0
  %1195 = vmatpush1.msra.mxu0 %v1152
  %1196 = vmatprep.subr.mxu0 0.0
  %1197 = vmatpush1.msra.mxu0 %v1153
  %1198 = vmatprep.subr.mxu0 0.0
  %1199 = vmatpush1.msra.mxu0 %v1154
  %1200 = vmatprep.subr.mxu0 0.0
  %1201 = vmatpush1.msra.mxu0 %v1155
  %1202 = vmatprep.subr.mxu0 0.0
  %1203 = vmatpush1.msra.mxu0 %v1156
  %1204 = vmatprep.subr.mxu0 0.0
  %1205 = vmatpush1.msra.mxu0 0.0
  %1206 = vmatprep.subr.mxu0 0.0
  %1207 = vmatpush1.msra.mxu0 0.0
  %1208 = vmatprep.subr.mxu0 0.0
  %1209 = vmatpush1.msra.mxu0 0.0
  %1210 = vmatprep.subr.mxu0 0.0
  %1211 = vmatpush1.msra.mxu0 0.0
  %1212 = vmatprep.subr.mxu0 0.0
  %1213 = vmatpush1.msra.mxu0 0.0
  %1214 = vmatprep.subr.mxu0 0.0
  %1215 = vmatpush1.msra.mxu0 0.0
  %1216 = vmatprep.subr.mxu0 0.0
  %1217 = vmatpush1.msra.mxu0 0.0
  %1218 = vmatprep.subr.mxu0 0.0
  %1219 = vmatpush1.msra.mxu0 0.0
  %1220 = vmatprep.subr.mxu0 0.0
  %1221 = vmatpush1.msra.mxu0 0.0
  %1222 = vmatprep.subr.mxu0 0.0
  %1223 = vmatpush1.msra.mxu0 0.0
  %1224 = vmatprep.subr.mxu0 0.0
  %1225 = vmatpush1.msra.mxu0 0.0
  %1226 = vmatprep.subr.mxu0 0.0
  %1227 = vmatpush1.msra.mxu0 0.0
  %1228 = vmatprep.subr.mxu0 0.0
  %1229 = vmatpush1.msra.mxu0 0.0
  %1230 = vmatprep.subr.mxu0 0.0
  %1231 = vmatpush1.msra.mxu0 0.0
  %1232 = vmatprep.subr.mxu0 0.0
  %1233 = vmatpush1.msra.mxu0 0.0
  %1234 = vmatprep.subr.mxu0 0.0
  %1235 = vmatpush1.msra.mxu0 0.0
  %1236 = vmatprep.subr.mxu0 0.0
  %1237 = vmatpush1.msra.mxu0 0.0
  %1238 = vmatprep.subr.mxu0 0.0
  %1239 = vmatpush1.msra.mxu0 0.0
  %1240 = vmatprep.subr.mxu0 0.0
  %1241 = vmatpush1.msra.mxu0 0.0
  %1242 = vmatprep.subr.mxu0 0.0
  %1243 = vmatpush1.msra.mxu0 0.0
  %1244 = vmatprep.subr.mxu0 0.0
  %1245 = vmatpush1.msra.mxu0 0.0
  %1246 = vmatprep.subr.mxu0 0.0
  %1247 = vmatpush1.msra.mxu0 0.0
  %1248 = vmatprep.subr.mxu0 0.0
  %1249 = vmatpush1.msra.mxu0 0.0
  %1250 = vmatprep.subr.mxu0 0.0
  %1251 = vmatpush1.msra.mxu0 0.0
  %1252 = vmatprep.mubr.f32.mxu0 0.0
  %1253 = vmatmul.mubr.f32.gmra.mrb[0].mxu0 %v1165
  %v1254 = vpop.f32.mrb[0].mxu0
  %v1255 = vadd.f32 %v1162, %v1254
  %v1256 = vpop.f32.mrb[0].mxu0
  %1257 = vmatprep.mubr.f32.mxu0 0.0
  %1258 = vmatmul.mubr.f32.gmra.mrb[0].mxu0 %v1168
  %v1259 = vpop.f32.mrb[0].mxu0
  %v1260 = vadd.f32 %v1162, %v1259
  %v1261 = vpop.f32.mrb[0].mxu0
  %1262 = vmatprep.mubr.f32.mxu0 0.0
  %1263 = vmatmul.mubr.f32.gmra.mrb[0].mxu0 %v1171
  %v1264 = vpop.f32.mrb[0].mxu0
  %v1265 = vadd.f32 %v1162, %v1264
  %v1266 = vpop.f32.mrb[0].mxu0
  %1267 = vmatprep.mubr.f32.mxu0 0.0
  %1268 = vmatmul.mubr.f32.gmra.mrb[0].mxu0 %v1174
  %v1269 = vpop.f32.mrb[0].mxu0
  %v1270 = vadd.f32 %v1162, %v1269
  %v1271 = vpop.f32.mrb[0].mxu0
  %1272 = vmatprep.mubr.f32.mxu0 0.0
  %1273 = vmatmul.mubr.f32.gmra.mrb[0].mxu0 %v1177
  %v1274 = vpop.f32.mrb[0].mxu0
  %v1275 = vadd.f32 %v1162, %v1274
  %v1276 = vpop.f32.mrb[0].mxu0
  %1277 = vmatprep.mubr.f32.mxu0 0.0
  %1278 = vmatmul.mubr.f32.gmra.mrb[0].mxu0 %v1180
  %v1279 = vpop.f32.mrb[0].mxu0
  %v1280 = vadd.f32 %v1162, %v1279
  %v1281 = vpop.f32.mrb[0].mxu0
  %1282 = vmatprep.mubr.f32.mxu0 0.0
  %1283 = vmatmul.mubr.f32.gmra.mrb[0].mxu0 %v1183
  %v1284 = vpop.f32.mrb[0].mxu0
  %v1285 = vadd.f32 %v1162, %v1284
  %v1286 = vpop.f32.mrb[0].mxu0
  %1287 = vmatprep.mubr.f32.mxu0 0.0
  %1288 = vmatmul.mubr.f32.gmra.mrb[0].mxu0 %v1186
  %v1289 = vpop.f32.mrb[0].mxu0
  %v1290 = vadd.f32 %v1162, %v1289
  %v1291 = vpop.f32.mrb[0].mxu0
  %1292 = vdwg.mxu0
  %vm1293 = vcmask 31744
  %1294 = vst.msk [vmem:[%s10] sm:$0xff] %vm1293, %v1255
  %1295 = vst.msk [vmem:[%s10 + $0x8] sm:$0xff] %vm1293, %v1260
  %1296 = vst.msk [vmem:[%s10 + $0x10] sm:$0xff] %vm1293, %v1265
  %1297 = vst.msk [vmem:[%s10 + $0x18] sm:$0xff] %vm1293, %v1270
  %1298 = vst.msk [vmem:[%s10 + $0x20] sm:$0xff] %vm1293, %v1275
  %1299 = vst.msk [vmem:[%s10 + $0x28] sm:$0xff] %vm1293, %v1280
  %1300 = vst.msk [vmem:[%s10 + $0x30] sm:$0xff] %vm1293, %v1285
  %1301 = vst.msk [vmem:[%s10 + $0x38] sm:$0xff] %vm1293, %v1290
  // Predicated region
  $region42: #{decoder_future_forward.1} parent=0 // pred_check
    _
  $region43: #{decoder_future_forward.1} parent=0 // pred_check_branch
    %1303 = sbr.rel (0) target = $region45
  $region44: #{decoder_future_forward.1} parent=0 // pred_region
    _
  $region45: #{decoder_future_forward.1} parent=0 // pred_fallthru
    _
  // Predicated region
  $region46: #{decoder_future_forward.1} parent=0 // pred_check
    _
  $region47: #{decoder_future_forward.1} parent=0 // pred_check_branch
    %1305 = sbr.rel (0) target = $region49
  $region48: #{decoder_future_forward.1} parent=0 // pred_region
    _
  $region49: #{decoder_future_forward.1} parent=0 // pred_fallthru
    _

</llo_original>
